<compile_context>
chip_gen: v7x
topology: tpu7x:2x2x1
jax: 0.10.0
libtpu: 0.0.40
codegen_flags: <defaults>
</compile_context>

<pallas_src>
import functools

import jax
import jax.numpy as jnp
from jax.experimental import pallas as pl
from jax.experimental.pallas import tpu as pltpu

# Logical (PyTorch) dims.
D_IN, D_H1, D_H2, D_OUT = 784, 300, 100, 10
# Lane-aligned padded dims for resident weights / output (padding weights is free).
P_H1, P_H2, P_OUT = 384, 128, 128


def _round_up(n, m):
    return ((n + m - 1) // m) * m


def fc3_kernel(x_ref, w1_ref, b1_ref, w2_ref, b2_ref, w3_ref, b3_ref, out_ref):
    wdt = w1_ref.dtype                               # bf16 weights, f32 accumulation

    # fc1 + ReLU   (x already bf16: (TB, 784) @ (784, 384))
    h1 = jnp.dot(x_ref[...], w1_ref[...],
                 preferred_element_type=jnp.float32) + b1_ref[...]
    h1 = jnp.maximum(h1, 0.0)                        # (TB, 384) f32

    # Dropout(p=0.4): identity in eval mode.
    # TODO(synk): training-mode dropout mask (torch RNG) has no exact Pallas
    # equivalent; implemented as eval-mode identity.

    # fc2 + ReLU
    h2 = jnp.dot(h1.astype(wdt), w2_ref[...],
                 preferred_element_type=jnp.float32) + b2_ref[...]
    h2 = jnp.maximum(h2, 0.0)                        # (TB, 128) f32

    # fused fc3:  cat([h2, h2 @ mat]) @ W3 + b3  ==  h2 @ W3_fused + b3
    logits = jnp.dot(h2.astype(wdt), w3_ref[...],
                     preferred_element_type=jnp.float32) + b3_ref[...]
    # 128-lane dense bf16 store (unmasked vst); wrapper strips padding.
    out_ref[...] = jnp.maximum(logits, 0.0).astype(out_ref.dtype)


@functools.partial(jax.jit, static_argnames=("max_tile",))
def fc3_forward(x_nchw, params, max_tile=1024):
    B = x_nchw.shape[0]
    # Flatten + single bf16 cast: this is the stream the kernel is bound by.
    x = x_nchw.reshape(B, -1).astype(jnp.bfloat16)   # (B, 784) bf16

    # Pad batch only to a sublane multiple (<= 7 junk rows); never to a tile multiple.
    b_pad = _round_up(max(B, 8), 8)
    if b_pad != B:
        x = jnp.pad(x, ((0, b_pad - B), (0, 0)))

    # Batch tile: >= 2 grid iterations whenever possible (v7x megacore), capped by
    # max_tile for per-step-overhead amortization on v5e/v6e.
    tb = min(max_tile, max(8, _round_up(pl.cdiv(b_pad, 2), 8)))
    grid = (pl.cdiv(b_pad, tb),)

    weight_bytes = sum(int(p.size) * p.dtype.itemsize for p in params.values())
    cost = pl.CostEstimate(
        flops=2 * b_pad * (D_IN * P_H1 + P_H1 * P_H2 + P_H2 * P_OUT),
        transcendentals=0,
        bytes_accessed=weight_bytes + b_pad * D_IN * 2 + b_pad * P_OUT * 2,
    )

    out = pl.pallas_call(
        fc3_kernel,
        out_shape=jax.ShapeDtypeStruct((b_pad, P_OUT), jnp.bfloat16),
        grid=grid,
        in_specs=[
            pl.BlockSpec((tb, D_IN), lambda i: (i, 0)),      # x: streamed over batch
            pl.BlockSpec((D_IN, P_H1), lambda i: (0, 0)),    # w1: VMEM-resident
            pl.BlockSpec((1, P_H1), lambda i: (0, 0)),       # b1 (f32)
            pl.BlockSpec((P_H1, P_H2), lambda i: (0, 0)),    # w2
            pl.BlockSpec((1, P_H2), lambda i: (0, 0)),       # b2
            pl.BlockSpec((P_H2, P_OUT), lambda i: (0, 0)),   # w3_fused
            pl.BlockSpec((1, P_OUT), lambda i: (0, 0)),      # b3
        ],
        out_specs=pl.BlockSpec((tb, P_OUT), lambda i: (i, 0)),
        compiler_params=pltpu.CompilerParams(
            dimension_semantics=("parallel",)),
        cost_estimate=cost,
    )(x, params["w1"], params["b1"], params["w2"], params["b2"],
      params["w3_fused"], params["b3"])

    return out[:B, :D_OUT].astype(jnp.float32)       # strip batch + lane padding


def init_params(key, weight_dtype=jnp.bfloat16):
    ks = jax.random.split(key, 7)

    def uniform(k, shape, bound):
        return jax.random.uniform(k, shape, jnp.float32, -bound, bound)

    # PyTorch Linear default init: U(-1/sqrt(fan_in), 1/sqrt(fan_in)),
    # weights stored transposed relative to torch: (in, out).
    w1 = uniform(ks[0], (D_IN, D_H1), 1.0 / jnp.sqrt(784.0))
    b1 = uniform(ks[1], (1, D_H1), 1.0 / jnp.sqrt(784.0))
    w2 = uniform(ks[2], (D_H1, D_H2), 1.0 / jnp.sqrt(300.0))
    b2 = uniform(ks[3], (1, D_H2), 1.0 / jnp.sqrt(300.0))
    w3 = uniform(ks[4], (2 * D_H2, D_OUT), 1.0 / jnp.sqrt(200.0))
    b3 = uniform(ks[5], (1, D_OUT), 1.0 / jnp.sqrt(200.0))
    # registered buffer: torch.rand(100, 100) ~ U[0, 1)
    mat_branch = jax.random.uniform(ks[6], (D_H2, D_H2), jnp.float32, 0.0, 1.0)

    # Exact algebraic fusion of the branch (done in f32 before any bf16 cast):
    #   cat([h2, h2 @ M]) @ W3 = h2 @ (W3[:100] + M @ W3[100:])
    w3_fused = w3[:D_H2, :] + mat_branch @ w3[D_H2:, :]

    def pad2(a, rows, cols):
        return jnp.pad(a, ((0, rows - a.shape[0]), (0, cols - a.shape[1])))

    return {
        "w1": pad2(w1, D_IN, P_H1).astype(weight_dtype),   # (784, 384)
        "b1": pad2(b1, 1, P_H1),                           # biases stay f32
        "w2": pad2(w2, P_H1, P_H2).astype(weight_dtype),   # (384, 128)
        "b2": pad2(b2, 1, P_H2),
        "w3_fused": pad2(w3_fused, P_H2, P_OUT).astype(weight_dtype),  # (128, 128)
        "b3": pad2(b3, 1, P_OUT),
    }


if __name__ == "__main__":
    key = jax.random.PRNGKey(0)
    k_params, k_x = jax.random.split(key)

    params = init_params(k_params)
    # Small deterministic input consistent with Flatten -> 784 features (MNIST-like).
    x = jax.random.normal(k_x, (2, 1, 28, 28), jnp.float32)

    out = fc3_forward(x, params)
    out = jax.block_until_ready(out)
    assert out.shape == (2, 10) and out.dtype == jnp.float32
    assert bool(jnp.all(jnp.isfinite(out)))

    # Self-consistency reference using the same fused/padded/bf16 parameters.
    xf = x.reshape(2, -1).astype(jnp.bfloat16)
    wdt = params["w1"].dtype
    h1 = jnp.maximum(jnp.dot(xf, params["w1"],
                             preferred_element_type=jnp.float32) + params["b1"], 0.0)
    h2 = jnp.maximum(jnp.dot(h1.astype(wdt), params["w2"],
                             preferred_element_type=jnp.float32) + params["b2"], 0.0)
    ref = jnp.maximum(jnp.dot(h2.astype(wdt), params["w3_fused"],
                              preferred_element_type=jnp.float32) + params["b3"],
                      0.0)[:, :D_OUT]
    # Kernel output additionally passes through a bf16 store; allow that rounding.
    assert jnp.allclose(out, ref, atol=5e-2, rtol=2e-2)

    print("KERNEL_OK")
</pallas_src>

<mosaic_0001>
module attributes {stable_mosaic.version = 11 : i64} {
  func.func @fc3_kernel(%arg0: i32, %arg1: memref<8x784xbf16, #tpu.memory_space<vmem>>, %arg2: memref<784x384xbf16, #tpu.memory_space<vmem>>, %arg3: memref<1x384xf32, #tpu.memory_space<vmem>>, %arg4: memref<384x128xbf16, #tpu.memory_space<vmem>>, %arg5: memref<1x128xf32, #tpu.memory_space<vmem>>, %arg6: memref<128x128xbf16, #tpu.memory_space<vmem>>, %arg7: memref<1x128xf32, #tpu.memory_space<vmem>>, %arg8: memref<8x128xbf16, #tpu.memory_space<vmem>>) attributes {dimension_semantics = [#tpu.dimension_semantics<parallel>], iteration_bounds = array<i64: 1>, scalar_prefetch = 0 : i64, scratch_operands = 0 : i64, tpu.core_type = #tpu.core_type<tc>, window_params = [{transform_indices = @transform_0, window_bounds = array<i64: 8, 784>}, {pipeline_mode = #tpu.pipeline_mode<synchronous>, transform_indices = @transform_1, window_bounds = array<i64: 784, 384>}, {pipeline_mode = #tpu.pipeline_mode<synchronous>, transform_indices = @transform_2, window_bounds = array<i64: 1, 384>}, {pipeline_mode = #tpu.pipeline_mode<synchronous>, transform_indices = @transform_3, window_bounds = array<i64: 384, 128>}, {pipeline_mode = #tpu.pipeline_mode<synchronous>, transform_indices = @transform_4, window_bounds = array<i64: 1, 128>}, {pipeline_mode = #tpu.pipeline_mode<synchronous>, transform_indices = @transform_5, window_bounds = array<i64: 128, 128>}, {pipeline_mode = #tpu.pipeline_mode<synchronous>, transform_indices = @transform_6, window_bounds = array<i64: 1, 128>}, {transform_indices = @transform_7, window_bounds = array<i64: 8, 128>}]} {
    %c0 = arith.constant 0 : index
    %c0_0 = arith.constant 0 : index
    %0 = vector.load %arg1[%c0, %c0_0] : memref<8x784xbf16, #tpu.memory_space<vmem>>, vector<8x784xbf16>
    %c0_1 = arith.constant 0 : index
    %c0_2 = arith.constant 0 : index
    %1 = vector.load %arg2[%c0_1, %c0_2] : memref<784x384xbf16, #tpu.memory_space<vmem>>, vector<784x384xbf16>
    %cst = arith.constant dense<0.000000e+00> : vector<8x384xf32>
    %2 = tpu.matmul %0, %1, %cst {dimension_numbers = #tpu.dot_dimension_numbers<[1], [0], [0], [1], [0, 0, 1, 1], [], []>} : vector<8x784xbf16>, vector<784x384xbf16>, vector<8x384xf32> -> vector<8x384xf32>
    %c0_3 = arith.constant 0 : index
    %c0_4 = arith.constant 0 : index
    %3 = vector.load %arg3[%c0_3, %c0_4] : memref<1x384xf32, #tpu.memory_space<vmem>>, vector<1x384xf32>
    %4 = vector.broadcast %3 : vector<1x384xf32> to vector<8x384xf32>
    %5 = arith.addf %2, %4 : vector<8x384xf32>
    %cst_5 = arith.constant 0.000000e+00 : f32
    %6 = vector.broadcast %cst_5 : f32 to vector<8x384xf32>
    %7 = arith.maximumf %5, %6 : vector<8x384xf32>
    %8 = arith.truncf %7 : vector<8x384xf32> to vector<8x384xbf16>
    %c0_6 = arith.constant 0 : index
    %c0_7 = arith.constant 0 : index
    %9 = vector.load %arg4[%c0_6, %c0_7] : memref<384x128xbf16, #tpu.memory_space<vmem>>, vector<384x128xbf16>
    %cst_8 = arith.constant dense<0.000000e+00> : vector<8x128xf32>
    %10 = tpu.matmul %8, %9, %cst_8 {dimension_numbers = #tpu.dot_dimension_numbers<[1], [0], [0], [1], [0, 0, 1, 1], [], []>} : vector<8x384xbf16>, vector<384x128xbf16>, vector<8x128xf32> -> vector<8x128xf32>
    %c0_9 = arith.constant 0 : index
    %c0_10 = arith.constant 0 : index
    %11 = vector.load %arg5[%c0_9, %c0_10] : memref<1x128xf32, #tpu.memory_space<vmem>>, vector<1x128xf32>
    %12 = vector.broadcast %11 : vector<1x128xf32> to vector<8x128xf32>
    %13 = arith.addf %10, %12 : vector<8x128xf32>
    %cst_11 = arith.constant 0.000000e+00 : f32
    %14 = vector.broadcast %cst_11 : f32 to vector<8x128xf32>
    %15 = arith.maximumf %13, %14 : vector<8x128xf32>
    %16 = arith.truncf %15 : vector<8x128xf32> to vector<8x128xbf16>
    %c0_12 = arith.constant 0 : index
    %c0_13 = arith.constant 0 : index
    %17 = vector.load %arg6[%c0_12, %c0_13] : memref<128x128xbf16, #tpu.memory_space<vmem>>, vector<128x128xbf16>
    %cst_14 = arith.constant dense<0.000000e+00> : vector<8x128xf32>
    %18 = tpu.matmul %16, %17, %cst_14 {dimension_numbers = #tpu.dot_dimension_numbers<[1], [0], [0], [1], [0, 0, 1, 1], [], []>} : vector<8x128xbf16>, vector<128x128xbf16>, vector<8x128xf32> -> vector<8x128xf32>
    %c0_15 = arith.constant 0 : index
    %c0_16 = arith.constant 0 : index
    %19 = vector.load %arg7[%c0_15, %c0_16] : memref<1x128xf32, #tpu.memory_space<vmem>>, vector<1x128xf32>
    %20 = vector.broadcast %19 : vector<1x128xf32> to vector<8x128xf32>
    %21 = arith.addf %18, %20 : vector<8x128xf32>
    %cst_17 = arith.constant 0.000000e+00 : f32
    %22 = vector.broadcast %cst_17 : f32 to vector<8x128xf32>
    %23 = arith.maximumf %21, %22 : vector<8x128xf32>
    %24 = arith.truncf %23 : vector<8x128xf32> to vector<8x128xbf16>
    %c0_18 = arith.constant 0 : index
    %c0_19 = arith.constant 0 : index
    %25 = vector.load %arg8[%c0_18, %c0_19] : memref<8x128xbf16, #tpu.memory_space<vmem>>, vector<8x128xbf16>
    tpu.vector_store %arg8[%c0_18, %c0_19], %24 {strides = array<i32>} : memref<8x128xbf16, #tpu.memory_space<vmem>>, vector<8x128xbf16>,
    return
  }
  func.func @transform_0(%arg0: i32) -> (i32, i32) {
    %c0_i32 = arith.constant 0 : i32
    %c0_i32_0 = arith.constant 0 : i32
    return %arg0, %c0_i32 : i32, i32
  }
  func.func @transform_1(%arg0: i32) -> (i32, i32) {
    %c0_i32 = arith.constant 0 : i32
    %c0_i32_0 = arith.constant 0 : i32
    %c0_i32_1 = arith.constant 0 : i32
    return %c0_i32, %c0_i32_0 : i32, i32
  }
  func.func @transform_2(%arg0: i32) -> (i32, i32) {
    %c0_i32 = arith.constant 0 : i32
    %c0_i32_0 = arith.constant 0 : i32
    %c0_i32_1 = arith.constant 0 : i32
    return %c0_i32, %c0_i32_0 : i32, i32
  }
  func.func @transform_3(%arg0: i32) -> (i32, i32) {
    %c0_i32 = arith.constant 0 : i32
    %c0_i32_0 = arith.constant 0 : i32
    %c0_i32_1 = arith.constant 0 : i32
    return %c0_i32, %c0_i32_0 : i32, i32
  }
  func.func @transform_4(%arg0: i32) -> (i32, i32) {
    %c0_i32 = arith.constant 0 : i32
    %c0_i32_0 = arith.constant 0 : i32
    %c0_i32_1 = arith.constant 0 : i32
    return %c0_i32, %c0_i32_0 : i32, i32
  }
  func.func @transform_5(%arg0: i32) -> (i32, i32) {
    %c0_i32 = arith.constant 0 : i32
    %c0_i32_0 = arith.constant 0 : i32
    %c0_i32_1 = arith.constant 0 : i32
    return %c0_i32, %c0_i32_0 : i32, i32
  }
  func.func @transform_6(%arg0: i32) -> (i32, i32) {
    %c0_i32 = arith.constant 0 : i32
    %c0_i32_0 = arith.constant 0 : i32
    %c0_i32_1 = arith.constant 0 : i32
    return %c0_i32, %c0_i32_0 : i32, i32
  }
  func.func @transform_7(%arg0: i32) -> (i32, i32) {
    %c0_i32 = arith.constant 0 : i32
    %c0_i32_0 = arith.constant 0 : i32
    return %arg0, %c0_i32 : i32, i32
  }
}

</mosaic_0001>

<llo_original>
// kernel: fc3_forward.1
$region0: #{fc3_forward.1}
  #allocation0 [shape = 'u32[]', space=smem, size = 0x4, offset = 0x4, fixed_abs, tag = 'smem constant byte address 0x4 - core index']
  #allocation1 [shape = 'u32[144,128]{1,0:T(1,128)}', space=vmem, size = 0x12000, scoped, tag = 'internal scratch']
  %s0 = inlined_call_operand.vmem [shape: bf16[8,784], index: 0, kind: input, shape index: {}]
  %s1 = inlined_call_operand.hbm [shape: bf16[784,384], index: 1, kind: input, shape index: {}]
  %s2 = inlined_call_operand.vmem [shape: f32[1,384], index: 2, kind: input, shape index: {}]
  %s3 = inlined_call_operand.hbm [shape: bf16[384,128], index: 3, kind: input, shape index: {}]
  %s4 = inlined_call_operand.vmem [shape: f32[1,128], index: 4, kind: input, shape index: {}]
  %s5 = inlined_call_operand.vmem [shape: bf16[128,128], index: 5, kind: input, shape index: {}]
  %s6 = inlined_call_operand.vmem [shape: f32[1,128], index: 6, kind: input, shape index: {}]
  %s7 = inlined_call_operand.vmem [shape: bf16[8,128], index: 7, kind: output, shape index: {}]
  %s8 = sld [smem:[#allocation0]]
  $region46: #{fc3_forward.1} parent=0
    _
  %s10 = ssub.s32 1, %s8
  %s11 = scalar_select 0, %s10, %s8
  $region1: #{fc3_forward.1} parent=0
    #allocation2 [shape = 'u8[602112]{0}', space=vmem, size = 0x93000, scoped, tag = 'input window, operand 1, single buffered']
    #allocation3 [shape = 's32[1]{0}', space=sflag, size = 0x4, scoped, tag = 'scoped memory for fc3_forward.1']
    #allocation4 [shape = 'u8[98304]{0}', space=vmem, size = 0x18000, scoped, tag = 'input window, operand 3, single buffered']
    #allocation5 [shape = 's32[1]{0}', space=sflag, size = 0x4, scoped, tag = 'scoped memory for fc3_forward.1']
    %12 = vsyncpa [#allocation3], 0
    %13 = vsyncpa [#allocation5], 0
    // Predicated region
    $region2: #{fc3_forward.1} parent=1 // pred_check
      _
    $region3: #{fc3_forward.1} parent=1 // pred_check_branch
      %15 = sbr.rel (0) target = $region5
    $region4: #{fc3_forward.1} parent=1 // pred_region
      _
    $region5: #{fc3_forward.1} parent=1 // pred_fallthru
      _
    // Predicated region
    $region6: #{fc3_forward.1} parent=1 // pred_check
      _
    $region7: #{fc3_forward.1} parent=1 // pred_check_branch
      %17 = sbr.rel (0) target = $region9
    $region8: #{fc3_forward.1} parent=1 // pred_region
      %s19 = ssub.s32 18816, 18816
      %20 = vsyncadd [#allocation3], %s19
      %s21 = sshll.u32 [#allocation2], 4
      %s22 = int_to_ptr.vmem [resolvable:$true] %s21
      %27 = dma.hbm_to_vmem [thread:$0]  %s1, 18816, %s22, [#allocation3], 192, 192, 12
    $region9: #{fc3_forward.1} parent=1 // pred_fallthru
      _
    // Predicated region
    $region10: #{fc3_forward.1} parent=1 // pred_check
      _
    $region11: #{fc3_forward.1} parent=1 // pred_check_branch
      %29 = sbr.rel (0) target = $region13
    $region12: #{fc3_forward.1} parent=1 // pred_region
      _
    $region13: #{fc3_forward.1} parent=1 // pred_fallthru
      _
    // Predicated region
    $region14: #{fc3_forward.1} parent=1 // pred_check
      _
    $region15: #{fc3_forward.1} parent=1 // pred_check_branch
      %31 = sbr.rel (0) target = $region17
    $region16: #{fc3_forward.1} parent=1 // pred_region
      %s33 = ssub.s32 3072, 3072
      %34 = vsyncadd [#allocation5], %s33
      %s35 = sshll.u32 [#allocation4], 4
      %s36 = int_to_ptr.vmem [resolvable:$true] %s35
      %41 = dma.hbm_to_vmem [thread:$0]  %s3, 3072, %s36, [#allocation5], 64, 64, 4
    $region17: #{fc3_forward.1} parent=1 // pred_fallthru
      _
    // Predicated region
    $region18: #{fc3_forward.1} parent=1 // pred_check
      _
    $region19: #{fc3_forward.1} parent=1 // pred_check_branch
      %43 = sbr.rel (0) target = $region21
    $region20: #{fc3_forward.1} parent=1 // pred_region
      _
    $region21: #{fc3_forward.1} parent=1 // pred_fallthru
      _
    // Predicated region
    $region22: #{fc3_forward.1} parent=1 // pred_check
      _
    $region23: #{fc3_forward.1} parent=1 // pred_check_branch
      %45 = sbr.rel (0) target = $region25
    $region24: #{fc3_forward.1} parent=1 // pred_region
      _
    $region25: #{fc3_forward.1} parent=1 // pred_fallthru
      _
    // Predicated region
    $region26: #{fc3_forward.1} parent=1 // pred_check
      _
    $region27: #{fc3_forward.1} parent=1 // pred_check_branch
      %47 = sbr.rel (0) target = $region29
    $region28: #{fc3_forward.1} parent=1 // pred_region
      _
    $region29: #{fc3_forward.1} parent=1 // pred_fallthru
      _
    // Predicated region
    $region30: #{fc3_forward.1} parent=1 // pred_check
      _
    $region31: #{fc3_forward.1} parent=1 // pred_check_branch
      %49 = sbr.rel (0) target = $region33
    $region32: #{fc3_forward.1} parent=1 // pred_region
      %50 = dma.done [#allocation3], 18816
    $region33: #{fc3_forward.1} parent=1 // pred_fallthru
      _
    // Predicated region
    $region34: #{fc3_forward.1} parent=1 // pred_check
      _
    $region35: #{fc3_forward.1} parent=1 // pred_check_branch
      %52 = sbr.rel (0) target = $region37
    $region36: #{fc3_forward.1} parent=1 // pred_region
      %53 = dma.done [#allocation5], 3072
    $region37: #{fc3_forward.1} parent=1 // pred_fallthru
      _
    %v55 = vld [vmem:[%s0] sm:$0xff]
    %v56 = vld [vmem:[%s0 + $0x8] sm:$0xff]
    %v57 = vld [vmem:[%s0 + $0x10] sm:$0xff]
    %v58 = vld [vmem:[%s0 + $0x18] sm:$0xf]
    %v59 = vld [vmem:[#allocation2] sm:$0xff]
    %v60 = vld [vmem:[#allocation2 + $0x8] sm:$0xf]
    %v61 = vld [vmem:[#allocation2 + $0xc] sm:$0xff]
    %v62 = vld [vmem:[#allocation2 + $0x14] sm:$0xf]
    %v63 = vld [vmem:[#allocation2 + $0x18] sm:$0xff]
    %v64 = vld [vmem:[#allocation2 + $0x20] sm:$0xf]
    %v65 = vld [vmem:[#allocation2 + $0x24] sm:$0xff]
    %v66 = vld [vmem:[#allocation2 + $0x2c] sm:$0xf]
    %v67 = vld [vmem:[#allocation2 + $0x30] sm:$0xff]
    %v68 = vld [vmem:[#allocation2 + $0x38] sm:$0xf]
    %v69 = vld [vmem:[#allocation2 + $0x3c] sm:$0xff]
    %v70 = vld [vmem:[#allocation2 + $0x44] sm:$0xf]
    %v71 = vld [vmem:[#allocation2 + $0x48] sm:$0xff]
    %v72 = vld [vmem:[#allocation2 + $0x50] sm:$0xf]
    %v73 = vld [vmem:[#allocation2 + $0x54] sm:$0xff]
    %v74 = vld [vmem:[#allocation2 + $0x5c] sm:$0xf]
    %v75 = vld [vmem:[#allocation2 + $0x60] sm:$0xff]
    %v76 = vld [vmem:[#allocation2 + $0x68] sm:$0xf]
    %v77 = vld [vmem:[#allocation2 + $0x6c] sm:$0xff]
    %v78 = vld [vmem:[#allocation2 + $0x74] sm:$0xf]
    %v79 = vld [vmem:[#allocation2 + $0x78] sm:$0xff]
    %v80 = vld [vmem:[#allocation2 + $0x80] sm:$0xf]
    %v81 = vld [vmem:[#allocation2 + $0x84] sm:$0xff]
    %v82 = vld [vmem:[#allocation2 + $0x8c] sm:$0xf]
    %v83 = vld [vmem:[#allocation2 + $0x90] sm:$0xff]
    %v84 = vld [vmem:[#allocation2 + $0x98] sm:$0xf]
    %v85 = vld [vmem:[#allocation2 + $0x9c] sm:$0xff]
    %v86 = vld [vmem:[#allocation2 + $0xa4] sm:$0xf]
    %v87 = vld [vmem:[#allocation2 + $0xa8] sm:$0xff]
    %v88 = vld [vmem:[#allocation2 + $0xb0] sm:$0xf]
    %v89 = vld [vmem:[#allocation2 + $0xb4] sm:$0xff]
    %v90 = vld [vmem:[#allocation2 + $0xbc] sm:$0xf]
    %v91 = vld [vmem:[#allocation2 + $0xc0] sm:$0xff]
    %v92 = vld [vmem:[#allocation2 + $0xc8] sm:$0xf]
    %v93 = vld [vmem:[#allocation2 + $0xcc] sm:$0xff]
    %v94 = vld [vmem:[#allocation2 + $0xd4] sm:$0xf]
    %v95 = vld [vmem:[#allocation2 + $0xd8] sm:$0xff]
    %v96 = vld [vmem:[#allocation2 + $0xe0] sm:$0xf]
    %v97 = vld [vmem:[#allocation2 + $0xe4] sm:$0xff]
    %v98 = vld [vmem:[#allocation2 + $0xec] sm:$0xf]
    %v99 = vld [vmem:[#allocation2 + $0xf0] sm:$0xff]
    %v100 = vld [vmem:[#allocation2 + $0xf8] sm:$0xf]
    %v101 = vld [vmem:[#allocation2 + $0xfc] sm:$0xff]
    %v102 = vld [vmem:[#allocation2 + $0x104] sm:$0xf]
    %v103 = vld [vmem:[#allocation2 + $0x108] sm:$0xff]
    %v104 = vld [vmem:[#allocation2 + $0x110] sm:$0xf]
    %v105 = vld [vmem:[#allocation2 + $0x114] sm:$0xff]
    %v106 = vld [vmem:[#allocation2 + $0x11c] sm:$0xf]
    %v107 = vld [vmem:[#allocation2 + $0x120] sm:$0xff]
    %v108 = vld [vmem:[#allocation2 + $0x128] sm:$0xf]
    %v109 = vld [vmem:[#allocation2 + $0x12c] sm:$0xff]
    %v110 = vld [vmem:[#allocation2 + $0x134] sm:$0xf]
    %v111 = vld [vmem:[#allocation2 + $0x138] sm:$0xff]
    %v112 = vld [vmem:[#allocation2 + $0x140] sm:$0xf]
    %v113 = vld [vmem:[#allocation2 + $0x144] sm:$0xff]
    %v114 = vld [vmem:[#allocation2 + $0x14c] sm:$0xf]
    %v115 = vld [vmem:[#allocation2 + $0x150] sm:$0xff]
    %v116 = vld [vmem:[#allocation2 + $0x158] sm:$0xf]
    %v117 = vld [vmem:[#allocation2 + $0x15c] sm:$0xff]
    %v118 = vld [vmem:[#allocation2 + $0x164] sm:$0xf]
    %v119 = vld [vmem:[#allocation2 + $0x168] sm:$0xff]
    %v120 = vld [vmem:[#allocation2 + $0x170] sm:$0xf]
    %v121 = vld [vmem:[#allocation2 + $0x174] sm:$0xff]
    %v122 = vld [vmem:[#allocation2 + $0x17c] sm:$0xf]
    %v123 = vld [vmem:[#allocation2 + $0x180] sm:$0xff]
    %v124 = vld [vmem:[#allocation2 + $0x188] sm:$0xf]
    %v125 = vld [vmem:[#allocation2 + $0x18c] sm:$0xff]
    %v126 = vld [vmem:[#allocation2 + $0x194] sm:$0xf]
    %v127 = vld [vmem:[#allocation2 + $0x198] sm:$0xff]
    %v128 = vld [vmem:[#allocation2 + $0x1a0] sm:$0xf]
    %v129 = vld [vmem:[#allocation2 + $0x1a4] sm:$0xff]
    %v130 = vld [vmem:[#allocation2 + $0x1ac] sm:$0xf]
    %v131 = vld [vmem:[#allocation2 + $0x1b0] sm:$0xff]
    %v132 = vld [vmem:[#allocation2 + $0x1b8] sm:$0xf]
    %v133 = vld [vmem:[#allocation2 + $0x1bc] sm:$0xff]
    %v134 = vld [vmem:[#allocation2 + $0x1c4] sm:$0xf]
    %v135 = vld [vmem:[#allocation2 + $0x1c8] sm:$0xff]
    %v136 = vld [vmem:[#allocation2 + $0x1d0] sm:$0xf]
    %v137 = vld [vmem:[#allocation2 + $0x1d4] sm:$0xff]
    %v138 = vld [vmem:[#allocation2 + $0x1dc] sm:$0xf]
    %v139 = vld [vmem:[#allocation2 + $0x1e0] sm:$0xff]
    %v140 = vld [vmem:[#allocation2 + $0x1e8] sm:$0xf]
    %v141 = vld [vmem:[#allocation2 + $0x1ec] sm:$0xff]
    %v142 = vld [vmem:[#allocation2 + $0x1f4] sm:$0xf]
    %v143 = vld [vmem:[#allocation2 + $0x1f8] sm:$0xff]
    %v144 = vld [vmem:[#allocation2 + $0x200] sm:$0xf]
    %v145 = vld [vmem:[#allocation2 + $0x204] sm:$0xff]
    %v146 = vld [vmem:[#allocation2 + $0x20c] sm:$0xf]
    %v147 = vld [vmem:[#allocation2 + $0x210] sm:$0xff]
    %v148 = vld [vmem:[#allocation2 + $0x218] sm:$0xf]
    %v149 = vld [vmem:[#allocation2 + $0x21c] sm:$0xff]
    %v150 = vld [vmem:[#allocation2 + $0x224] sm:$0xf]
    %v151 = vld [vmem:[#allocation2 + $0x228] sm:$0xff]
    %v152 = vld [vmem:[#allocation2 + $0x230] sm:$0xf]
    %v153 = vld [vmem:[#allocation2 + $0x234] sm:$0xff]
    %v154 = vld [vmem:[#allocation2 + $0x23c] sm:$0xf]
    %v155 = vld [vmem:[#allocation2 + $0x240] sm:$0xff]
    %v156 = vld [vmem:[#allocation2 + $0x248] sm:$0xf]
    %v157 = vld [vmem:[#allocation2 + $0x24c] sm:$0xff]
    %v158 = vld [vmem:[#allocation2 + $0x254] sm:$0xf]
    %v159 = vld [vmem:[#allocation2 + $0x258] sm:$0xff]
    %v160 = vld [vmem:[#allocation2 + $0x260] sm:$0xf]
    %v161 = vld [vmem:[#allocation2 + $0x264] sm:$0xff]
    %v162 = vld [vmem:[#allocation2 + $0x26c] sm:$0xf]
    %v163 = vld [vmem:[#allocation2 + $0x270] sm:$0xff]
    %v164 = vld [vmem:[#allocation2 + $0x278] sm:$0xf]
    %v165 = vld [vmem:[#allocation2 + $0x27c] sm:$0xff]
    %v166 = vld [vmem:[#allocation2 + $0x284] sm:$0xf]
    %v167 = vld [vmem:[#allocation2 + $0x288] sm:$0xff]
    %v168 = vld [vmem:[#allocation2 + $0x290] sm:$0xf]
    %v169 = vld [vmem:[#allocation2 + $0x294] sm:$0xff]
    %v170 = vld [vmem:[#allocation2 + $0x29c] sm:$0xf]
    %v171 = vld [vmem:[#allocation2 + $0x2a0] sm:$0xff]
    %v172 = vld [vmem:[#allocation2 + $0x2a8] sm:$0xf]
    %v173 = vld [vmem:[#allocation2 + $0x2ac] sm:$0xff]
    %v174 = vld [vmem:[#allocation2 + $0x2b4] sm:$0xf]
    %v175 = vld [vmem:[#allocation2 + $0x2b8] sm:$0xff]
    %v176 = vld [vmem:[#allocation2 + $0x2c0] sm:$0xf]
    %v177 = vld [vmem:[#allocation2 + $0x2c4] sm:$0xff]
    %v178 = vld [vmem:[#allocation2 + $0x2cc] sm:$0xf]
    %v179 = vld [vmem:[#allocation2 + $0x2d0] sm:$0xff]
    %v180 = vld [vmem:[#allocation2 + $0x2d8] sm:$0xf]
    %v181 = vld [vmem:[#allocation2 + $0x2dc] sm:$0xff]
    %v182 = vld [vmem:[#allocation2 + $0x2e4] sm:$0xf]
    %v183 = vld [vmem:[#allocation2 + $0x2e8] sm:$0xff]
    %v184 = vld [vmem:[#allocation2 + $0x2f0] sm:$0xf]
    %v185 = vld [vmem:[#allocation2 + $0x2f4] sm:$0xff]
    %v186 = vld [vmem:[#allocation2 + $0x2fc] sm:$0xf]
    %v187 = vld [vmem:[#allocation2 + $0x300] sm:$0xff]
    %v188 = vld [vmem:[#allocation2 + $0x308] sm:$0xf]
    %v189 = vld [vmem:[#allocation2 + $0x30c] sm:$0xff]
    %v190 = vld [vmem:[#allocation2 + $0x314] sm:$0xf]
    %v191 = vld [vmem:[#allocation2 + $0x318] sm:$0xff]
    %v192 = vld [vmem:[#allocation2 + $0x320] sm:$0xf]
    %v193 = vld [vmem:[#allocation2 + $0x324] sm:$0xff]
    %v194 = vld [vmem:[#allocation2 + $0x32c] sm:$0xf]
    %v195 = vld [vmem:[#allocation2 + $0x330] sm:$0xff]
    %v196 = vld [vmem:[#allocation2 + $0x338] sm:$0xf]
    %v197 = vld [vmem:[#allocation2 + $0x33c] sm:$0xff]
    %v198 = vld [vmem:[#allocation2 + $0x344] sm:$0xf]
    %v199 = vld [vmem:[#allocation2 + $0x348] sm:$0xff]
    %v200 = vld [vmem:[#allocation2 + $0x350] sm:$0xf]
    %v201 = vld [vmem:[#allocation2 + $0x354] sm:$0xff]
    %v202 = vld [vmem:[#allocation2 + $0x35c] sm:$0xf]
    %v203 = vld [vmem:[#allocation2 + $0x360] sm:$0xff]
    %v204 = vld [vmem:[#allocation2 + $0x368] sm:$0xf]
    %v205 = vld [vmem:[#allocation2 + $0x36c] sm:$0xff]
    %v206 = vld [vmem:[#allocation2 + $0x374] sm:$0xf]
    %v207 = vld [vmem:[#allocation2 + $0x378] sm:$0xff]
    %v208 = vld [vmem:[#allocation2 + $0x380] sm:$0xf]
    %v209 = vld [vmem:[#allocation2 + $0x384] sm:$0xff]
    %v210 = vld [vmem:[#allocation2 + $0x38c] sm:$0xf]
    %v211 = vld [vmem:[#allocation2 + $0x390] sm:$0xff]
    %v212 = vld [vmem:[#allocation2 + $0x398] sm:$0xf]
    %v213 = vld [vmem:[#allocation2 + $0x39c] sm:$0xff]
    %v214 = vld [vmem:[#allocation2 + $0x3a4] sm:$0xf]
    %v215 = vld [vmem:[#allocation2 + $0x3a8] sm:$0xff]
    %v216 = vld [vmem:[#allocation2 + $0x3b0] sm:$0xf]
    %v217 = vld [vmem:[#allocation2 + $0x3b4] sm:$0xff]
    %v218 = vld [vmem:[#allocation2 + $0x3bc] sm:$0xf]
    %v219 = vld [vmem:[#allocation2 + $0x3c0] sm:$0xff]
    %v220 = vld [vmem:[#allocation2 + $0x3c8] sm:$0xf]
    %v221 = vld [vmem:[#allocation2 + $0x3cc] sm:$0xff]
    %v222 = vld [vmem:[#allocation2 + $0x3d4] sm:$0xf]
    %v223 = vld [vmem:[#allocation2 + $0x3d8] sm:$0xff]
    %v224 = vld [vmem:[#allocation2 + $0x3e0] sm:$0xf]
    %v225 = vld [vmem:[#allocation2 + $0x3e4] sm:$0xff]
    %v226 = vld [vmem:[#allocation2 + $0x3ec] sm:$0xf]
    %v227 = vld [vmem:[#allocation2 + $0x3f0] sm:$0xff]
    %v228 = vld [vmem:[#allocation2 + $0x3f8] sm:$0xf]
    %v229 = vld [vmem:[#allocation2 + $0x3fc] sm:$0xff]
    %v230 = vld [vmem:[#allocation2 + $0x404] sm:$0xf]
    %v231 = vld [vmem:[#allocation2 + $0x408] sm:$0xff]
    %v232 = vld [vmem:[#allocation2 + $0x410] sm:$0xf]
    %v233 = vld [vmem:[#allocation2 + $0x414] sm:$0xff]
    %v234 = vld [vmem:[#allocation2 + $0x41c] sm:$0xf]
    %v235 = vld [vmem:[#allocation2 + $0x420] sm:$0xff]
    %v236 = vld [vmem:[#allocation2 + $0x428] sm:$0xf]
    %v237 = vld [vmem:[#allocation2 + $0x42c] sm:$0xff]
    %v238 = vld [vmem:[#allocation2 + $0x434] sm:$0xf]
    %v239 = vld [vmem:[#allocation2 + $0x438] sm:$0xff]
    %v240 = vld [vmem:[#allocation2 + $0x440] sm:$0xf]
    %v241 = vld [vmem:[#allocation2 + $0x444] sm:$0xff]
    %v242 = vld [vmem:[#allocation2 + $0x44c] sm:$0xf]
    %v243 = vld [vmem:[#allocation2 + $0x450] sm:$0xff]
    %v244 = vld [vmem:[#allocation2 + $0x458] sm:$0xf]
    %v245 = vld [vmem:[#allocation2 + $0x45c] sm:$0xff]
    %v246 = vld [vmem:[#allocation2 + $0x464] sm:$0xf]
    %v247 = vld [vmem:[#allocation2 + $0x468] sm:$0xff]
    %v248 = vld [vmem:[#allocation2 + $0x470] sm:$0xf]
    %v249 = vld [vmem:[#allocation2 + $0x474] sm:$0xff]
    %v250 = vld [vmem:[#allocation2 + $0x47c] sm:$0xf]
    %v251 = vld [vmem:[#allocation2 + $0x480] sm:$0xff]
    %v252 = vld [vmem:[#allocation2 + $0x488] sm:$0xf]
    %v253 = vld [vmem:[#allocation2 + $0x48c] sm:$0xff]
    %v254 = vld [vmem:[#allocation2 + $0x494] sm:$0xf]
    %v255 = vld [vmem:[%s2] sm:$0x7]
    %v257 = vlaneseq
    %v258 = vshrl.u32 %v257, 7
    %v259 = vsub.s32 0, %v258
    %v260 = vrot.slane %v255, %v259
    %v261 = vlaneseq
    %v262 = vshrl.u32 %v261, 7
    %v263 = vsub.s32 1, %v262
    %v264 = vrot.slane %v255, %v263
    %v265 = vlaneseq
    %v266 = vshrl.u32 %v265, 7
    %v267 = vsub.s32 2, %v266
    %v268 = vrot.slane %v255, %v267
    %v276 = vunpack.c.l.b16 %v55
    %v277 = vunpack.c.h.b16 %v55
    %v278 = vunpack.c.l.b16 %v56
    %v279 = vunpack.c.h.b16 %v56
    %v280 = vunpack.c.l.b16 %v57
    %v281 = vunpack.c.h.b16 %v57
    %v282 = vunpack.c.l.b16 %v58
    %v283 = vpack.c.b16 %v276, %v276
    %v284 = vpack.c.b16 %v277, %v277
    %v285 = vpack.c.b16 %v278, %v278
    %v286 = vpack.c.b16 %v279, %v279
    %v287 = vpack.c.b16 %v280, %v280
    %v288 = vpack.c.b16 %v281, %v281
    %v289 = vpack.c.b16 %v282, %v282
    %v492 = vunpack.c.l.b16 %v59
    %v493 = vunpack.c.h.b16 %v59
    %v494 = vunpack.c.l.b16 %v60
    %v495 = vunpack.c.l.b16 %v61
    %v496 = vunpack.c.h.b16 %v61
    %v497 = vunpack.c.l.b16 %v62
    %v498 = vunpack.c.l.b16 %v63
    %v499 = vunpack.c.h.b16 %v63
    %v500 = vunpack.c.l.b16 %v64
    %v501 = vunpack.c.l.b16 %v65
    %v502 = vunpack.c.h.b16 %v65
    %v503 = vunpack.c.l.b16 %v66
    %v504 = vunpack.c.l.b16 %v67
    %v505 = vunpack.c.h.b16 %v67
    %v506 = vunpack.c.l.b16 %v68
    %v507 = vunpack.c.l.b16 %v69
    %v508 = vunpack.c.h.b16 %v69
    %v509 = vunpack.c.l.b16 %v70
    %v510 = vunpack.c.l.b16 %v71
    %v511 = vunpack.c.h.b16 %v71
    %v512 = vunpack.c.l.b16 %v72
    %v513 = vunpack.c.l.b16 %v73
    %v514 = vunpack.c.h.b16 %v73
    %v515 = vunpack.c.l.b16 %v74
    %v516 = vunpack.c.l.b16 %v75
    %v517 = vunpack.c.h.b16 %v75
    %v518 = vunpack.c.l.b16 %v76
    %v519 = vunpack.c.l.b16 %v77
    %v520 = vunpack.c.h.b16 %v77
    %v521 = vunpack.c.l.b16 %v78
    %v522 = vunpack.c.l.b16 %v79
    %v523 = vunpack.c.h.b16 %v79
    %v524 = vunpack.c.l.b16 %v80
    %v525 = vunpack.c.l.b16 %v81
    %v526 = vunpack.c.h.b16 %v81
    %v527 = vunpack.c.l.b16 %v82
    %v528 = vunpack.c.l.b16 %v83
    %v529 = vunpack.c.h.b16 %v83
    %v530 = vunpack.c.l.b16 %v84
    %v531 = vunpack.c.l.b16 %v85
    %v532 = vunpack.c.h.b16 %v85
    %v533 = vunpack.c.l.b16 %v86
    %v534 = vunpack.c.l.b16 %v87
    %v535 = vunpack.c.h.b16 %v87
    %v536 = vunpack.c.l.b16 %v88
    %v537 = vunpack.c.l.b16 %v89
    %v538 = vunpack.c.h.b16 %v89
    %v539 = vunpack.c.l.b16 %v90
    %v540 = vunpack.c.l.b16 %v91
    %v541 = vunpack.c.h.b16 %v91
    %v542 = vunpack.c.l.b16 %v92
    %v543 = vunpack.c.l.b16 %v93
    %v544 = vunpack.c.h.b16 %v93
    %v545 = vunpack.c.l.b16 %v94
    %v546 = vunpack.c.l.b16 %v95
    %v547 = vunpack.c.h.b16 %v95
    %v548 = vunpack.c.l.b16 %v96
    %v549 = vunpack.c.l.b16 %v97
    %v550 = vunpack.c.h.b16 %v97
    %v551 = vunpack.c.l.b16 %v98
    %v552 = vunpack.c.l.b16 %v99
    %v553 = vunpack.c.h.b16 %v99
    %v554 = vunpack.c.l.b16 %v100
    %v555 = vunpack.c.l.b16 %v101
    %v556 = vunpack.c.h.b16 %v101
    %v557 = vunpack.c.l.b16 %v102
    %v558 = vunpack.c.l.b16 %v103
    %v559 = vunpack.c.h.b16 %v103
    %v560 = vunpack.c.l.b16 %v104
    %v561 = vunpack.c.l.b16 %v105
    %v562 = vunpack.c.h.b16 %v105
    %v563 = vunpack.c.l.b16 %v106
    %v564 = vunpack.c.l.b16 %v107
    %v565 = vunpack.c.h.b16 %v107
    %v566 = vunpack.c.l.b16 %v108
    %v567 = vunpack.c.l.b16 %v109
    %v568 = vunpack.c.h.b16 %v109
    %v569 = vunpack.c.l.b16 %v110
    %v570 = vunpack.c.l.b16 %v111
    %v571 = vunpack.c.h.b16 %v111
    %v572 = vunpack.c.l.b16 %v112
    %v573 = vunpack.c.l.b16 %v113
    %v574 = vunpack.c.h.b16 %v113
    %v575 = vunpack.c.l.b16 %v114
    %v576 = vunpack.c.l.b16 %v115
    %v577 = vunpack.c.h.b16 %v115
    %v578 = vunpack.c.l.b16 %v116
    %v579 = vunpack.c.l.b16 %v117
    %v580 = vunpack.c.h.b16 %v117
    %v581 = vunpack.c.l.b16 %v118
    %v582 = vunpack.c.l.b16 %v119
    %v583 = vunpack.c.h.b16 %v119
    %v584 = vunpack.c.l.b16 %v120
    %v585 = vunpack.c.l.b16 %v121
    %v586 = vunpack.c.h.b16 %v121
    %v587 = vunpack.c.l.b16 %v122
    %v588 = vunpack.c.l.b16 %v123
    %v589 = vunpack.c.h.b16 %v123
    %v590 = vunpack.c.l.b16 %v124
    %v591 = vunpack.c.l.b16 %v125
    %v592 = vunpack.c.h.b16 %v125
    %v593 = vunpack.c.l.b16 %v126
    %v594 = vunpack.c.l.b16 %v127
    %v595 = vunpack.c.h.b16 %v127
    %v596 = vunpack.c.l.b16 %v128
    %v597 = vunpack.c.l.b16 %v129
    %v598 = vunpack.c.h.b16 %v129
    %v599 = vunpack.c.l.b16 %v130
    %v600 = vunpack.c.l.b16 %v131
    %v601 = vunpack.c.h.b16 %v131
    %v602 = vunpack.c.l.b16 %v132
    %v603 = vunpack.c.l.b16 %v133
    %v604 = vunpack.c.h.b16 %v133
    %v605 = vunpack.c.l.b16 %v134
    %v606 = vunpack.c.l.b16 %v135
    %v607 = vunpack.c.h.b16 %v135
    %v608 = vunpack.c.l.b16 %v136
    %v609 = vunpack.c.l.b16 %v137
    %v610 = vunpack.c.h.b16 %v137
    %v611 = vunpack.c.l.b16 %v138
    %v612 = vunpack.c.l.b16 %v139
    %v613 = vunpack.c.h.b16 %v139
    %v614 = vunpack.c.l.b16 %v140
    %v615 = vunpack.c.l.b16 %v141
    %v616 = vunpack.c.h.b16 %v141
    %v617 = vunpack.c.l.b16 %v142
    %v618 = vunpack.c.l.b16 %v143
    %v619 = vunpack.c.h.b16 %v143
    %v620 = vunpack.c.l.b16 %v144
    %v621 = vunpack.c.l.b16 %v145
    %v622 = vunpack.c.h.b16 %v145
    %v623 = vunpack.c.l.b16 %v146
    %v624 = vunpack.c.l.b16 %v147
    %v625 = vunpack.c.h.b16 %v147
    %v626 = vunpack.c.l.b16 %v148
    %v627 = vunpack.c.l.b16 %v149
    %v628 = vunpack.c.h.b16 %v149
    %v629 = vunpack.c.l.b16 %v150
    %v630 = vunpack.c.l.b16 %v151
    %v631 = vunpack.c.h.b16 %v151
    %v632 = vunpack.c.l.b16 %v152
    %v633 = vunpack.c.l.b16 %v153
    %v634 = vunpack.c.h.b16 %v153
    %v635 = vunpack.c.l.b16 %v154
    %v636 = vunpack.c.l.b16 %v155
    %v637 = vunpack.c.h.b16 %v155
    %v638 = vunpack.c.l.b16 %v156
    %v639 = vunpack.c.l.b16 %v157
    %v640 = vunpack.c.h.b16 %v157
    %v641 = vunpack.c.l.b16 %v158
    %v642 = vunpack.c.l.b16 %v159
    %v643 = vunpack.c.h.b16 %v159
    %v644 = vunpack.c.l.b16 %v160
    %v645 = vunpack.c.l.b16 %v161
    %v646 = vunpack.c.h.b16 %v161
    %v647 = vunpack.c.l.b16 %v162
    %v648 = vunpack.c.l.b16 %v163
    %v649 = vunpack.c.h.b16 %v163
    %v650 = vunpack.c.l.b16 %v164
    %v651 = vunpack.c.l.b16 %v165
    %v652 = vunpack.c.h.b16 %v165
    %v653 = vunpack.c.l.b16 %v166
    %v654 = vunpack.c.l.b16 %v167
    %v655 = vunpack.c.h.b16 %v167
    %v656 = vunpack.c.l.b16 %v168
    %v657 = vunpack.c.l.b16 %v169
    %v658 = vunpack.c.h.b16 %v169
    %v659 = vunpack.c.l.b16 %v170
    %v660 = vunpack.c.l.b16 %v171
    %v661 = vunpack.c.h.b16 %v171
    %v662 = vunpack.c.l.b16 %v172
    %v663 = vunpack.c.l.b16 %v173
    %v664 = vunpack.c.h.b16 %v173
    %v665 = vunpack.c.l.b16 %v174
    %v666 = vunpack.c.l.b16 %v175
    %v667 = vunpack.c.h.b16 %v175
    %v668 = vunpack.c.l.b16 %v176
    %v669 = vunpack.c.l.b16 %v177
    %v670 = vunpack.c.h.b16 %v177
    %v671 = vunpack.c.l.b16 %v178
    %v672 = vunpack.c.l.b16 %v179
    %v673 = vunpack.c.h.b16 %v179
    %v674 = vunpack.c.l.b16 %v180
    %v675 = vunpack.c.l.b16 %v181
    %v676 = vunpack.c.h.b16 %v181
    %v677 = vunpack.c.l.b16 %v182
    %v678 = vunpack.c.l.b16 %v183
    %v679 = vunpack.c.h.b16 %v183
    %v680 = vunpack.c.l.b16 %v184
    %v681 = vunpack.c.l.b16 %v185
    %v682 = vunpack.c.h.b16 %v185
    %v683 = vunpack.c.l.b16 %v186
    %v684 = vunpack.c.l.b16 %v187
    %v685 = vunpack.c.h.b16 %v187
    %v686 = vunpack.c.l.b16 %v188
    %v687 = vunpack.c.l.b16 %v189
    %v688 = vunpack.c.h.b16 %v189
    %v689 = vunpack.c.l.b16 %v190
    %v690 = vunpack.c.l.b16 %v191
    %v691 = vunpack.c.h.b16 %v191
    %v692 = vunpack.c.l.b16 %v192
    %v693 = vunpack.c.l.b16 %v193
    %v694 = vunpack.c.h.b16 %v193
    %v695 = vunpack.c.l.b16 %v194
    %v696 = vunpack.c.l.b16 %v195
    %v697 = vunpack.c.h.b16 %v195
    %v698 = vunpack.c.l.b16 %v196
    %v699 = vunpack.c.l.b16 %v197
    %v700 = vunpack.c.h.b16 %v197
    %v701 = vunpack.c.l.b16 %v198
    %v702 = vunpack.c.l.b16 %v199
    %v703 = vunpack.c.h.b16 %v199
    %v704 = vunpack.c.l.b16 %v200
    %v705 = vunpack.c.l.b16 %v201
    %v706 = vunpack.c.h.b16 %v201
    %v707 = vunpack.c.l.b16 %v202
    %v708 = vunpack.c.l.b16 %v203
    %v709 = vunpack.c.h.b16 %v203
    %v710 = vunpack.c.l.b16 %v204
    %v711 = vunpack.c.l.b16 %v205
    %v712 = vunpack.c.h.b16 %v205
    %v713 = vunpack.c.l.b16 %v206
    %v714 = vunpack.c.l.b16 %v207
    %v715 = vunpack.c.h.b16 %v207
    %v716 = vunpack.c.l.b16 %v208
    %v717 = vunpack.c.l.b16 %v209
    %v718 = vunpack.c.h.b16 %v209
    %v719 = vunpack.c.l.b16 %v210
    %v720 = vunpack.c.l.b16 %v211
    %v721 = vunpack.c.h.b16 %v211
    %v722 = vunpack.c.l.b16 %v212
    %v723 = vunpack.c.l.b16 %v213
    %v724 = vunpack.c.h.b16 %v213
    %v725 = vunpack.c.l.b16 %v214
    %v726 = vunpack.c.l.b16 %v215
    %v727 = vunpack.c.h.b16 %v215
    %v728 = vunpack.c.l.b16 %v216
    %v729 = vunpack.c.l.b16 %v217
    %v730 = vunpack.c.h.b16 %v217
    %v731 = vunpack.c.l.b16 %v218
    %v732 = vunpack.c.l.b16 %v219
    %v733 = vunpack.c.h.b16 %v219
    %v734 = vunpack.c.l.b16 %v220
    %v735 = vunpack.c.l.b16 %v221
    %v736 = vunpack.c.h.b16 %v221
    %v737 = vunpack.c.l.b16 %v222
    %v738 = vunpack.c.l.b16 %v223
    %v739 = vunpack.c.h.b16 %v223
    %v740 = vunpack.c.l.b16 %v224
    %v741 = vunpack.c.l.b16 %v225
    %v742 = vunpack.c.h.b16 %v225
    %v743 = vunpack.c.l.b16 %v226
    %v744 = vunpack.c.l.b16 %v227
    %v745 = vunpack.c.h.b16 %v227
    %v746 = vunpack.c.l.b16 %v228
    %v747 = vunpack.c.l.b16 %v229
    %v748 = vunpack.c.h.b16 %v229
    %v749 = vunpack.c.l.b16 %v230
    %v750 = vunpack.c.l.b16 %v231
    %v751 = vunpack.c.h.b16 %v231
    %v752 = vunpack.c.l.b16 %v232
    %v753 = vunpack.c.l.b16 %v233
    %v754 = vunpack.c.h.b16 %v233
    %v755 = vunpack.c.l.b16 %v234
    %v756 = vunpack.c.l.b16 %v235
    %v757 = vunpack.c.h.b16 %v235
    %v758 = vunpack.c.l.b16 %v236
    %v759 = vunpack.c.l.b16 %v237
    %v760 = vunpack.c.h.b16 %v237
    %v761 = vunpack.c.l.b16 %v238
    %v762 = vunpack.c.l.b16 %v239
    %v763 = vunpack.c.h.b16 %v239
    %v764 = vunpack.c.l.b16 %v240
    %v765 = vunpack.c.l.b16 %v241
    %v766 = vunpack.c.h.b16 %v241
    %v767 = vunpack.c.l.b16 %v242
    %v768 = vunpack.c.l.b16 %v243
    %v769 = vunpack.c.h.b16 %v243
    %v770 = vunpack.c.l.b16 %v244
    %v771 = vunpack.c.l.b16 %v245
    %v772 = vunpack.c.h.b16 %v245
    %v773 = vunpack.c.l.b16 %v246
    %v774 = vunpack.c.l.b16 %v247
    %v775 = vunpack.c.h.b16 %v247
    %v776 = vunpack.c.l.b16 %v248
    %v777 = vunpack.c.l.b16 %v249
    %v778 = vunpack.c.h.b16 %v249
    %v779 = vunpack.c.l.b16 %v250
    %v780 = vunpack.c.l.b16 %v251
    %v781 = vunpack.c.h.b16 %v251
    %v782 = vunpack.c.l.b16 %v252
    %v783 = vunpack.c.l.b16 %v253
    %v784 = vunpack.c.h.b16 %v253
    %v785 = vunpack.c.l.b16 %v254
    %v786 = vpack.c.b16 %v495, %v492
    %v787 = vpack.c.b16 %v496, %v493
    %v788 = vpack.c.b16 %v497, %v494
    %v789 = vpack.c.b16 %v501, %v498
    %v790 = vpack.c.b16 %v502, %v499
    %v791 = vpack.c.b16 %v503, %v500
    %v792 = vpack.c.b16 %v507, %v504
    %v793 = vpack.c.b16 %v508, %v505
    %v794 = vpack.c.b16 %v509, %v506
    %v795 = vpack.c.b16 %v513, %v510
    %v796 = vpack.c.b16 %v514, %v511
    %v797 = vpack.c.b16 %v515, %v512
    %v798 = vpack.c.b16 %v519, %v516
    %v799 = vpack.c.b16 %v520, %v517
    %v800 = vpack.c.b16 %v521, %v518
    %v801 = vpack.c.b16 %v525, %v522
    %v802 = vpack.c.b16 %v526, %v523
    %v803 = vpack.c.b16 %v527, %v524
    %v804 = vpack.c.b16 %v531, %v528
    %v805 = vpack.c.b16 %v532, %v529
    %v806 = vpack.c.b16 %v533, %v530
    %v807 = vpack.c.b16 %v537, %v534
    %v808 = vpack.c.b16 %v538, %v535
    %v809 = vpack.c.b16 %v539, %v536
    %v810 = vpack.c.b16 %v543, %v540
    %v811 = vpack.c.b16 %v544, %v541
    %v812 = vpack.c.b16 %v545, %v542
    %v813 = vpack.c.b16 %v549, %v546
    %v814 = vpack.c.b16 %v550, %v547
    %v815 = vpack.c.b16 %v551, %v548
    %v816 = vpack.c.b16 %v555, %v552
    %v817 = vpack.c.b16 %v556, %v553
    %v818 = vpack.c.b16 %v557, %v554
    %v819 = vpack.c.b16 %v561, %v558
    %v820 = vpack.c.b16 %v562, %v559
    %v821 = vpack.c.b16 %v563, %v560
    %v822 = vpack.c.b16 %v567, %v564
    %v823 = vpack.c.b16 %v568, %v565
    %v824 = vpack.c.b16 %v569, %v566
    %v825 = vpack.c.b16 %v573, %v570
    %v826 = vpack.c.b16 %v574, %v571
    %v827 = vpack.c.b16 %v575, %v572
    %v828 = vpack.c.b16 %v579, %v576
    %v829 = vpack.c.b16 %v580, %v577
    %v830 = vpack.c.b16 %v581, %v578
    %v831 = vpack.c.b16 %v585, %v582
    %v832 = vpack.c.b16 %v586, %v583
    %v833 = vpack.c.b16 %v587, %v584
    %v834 = vpack.c.b16 %v591, %v588
    %v835 = vpack.c.b16 %v592, %v589
    %v836 = vpack.c.b16 %v593, %v590
    %v837 = vpack.c.b16 %v597, %v594
    %v838 = vpack.c.b16 %v598, %v595
    %v839 = vpack.c.b16 %v599, %v596
    %v840 = vpack.c.b16 %v603, %v600
    %v841 = vpack.c.b16 %v604, %v601
    %v842 = vpack.c.b16 %v605, %v602
    %v843 = vpack.c.b16 %v609, %v606
    %v844 = vpack.c.b16 %v610, %v607
    %v845 = vpack.c.b16 %v611, %v608
    %v846 = vpack.c.b16 %v615, %v612
    %v847 = vpack.c.b16 %v616, %v613
    %v848 = vpack.c.b16 %v617, %v614
    %v849 = vpack.c.b16 %v621, %v618
    %v850 = vpack.c.b16 %v622, %v619
    %v851 = vpack.c.b16 %v623, %v620
    %v852 = vpack.c.b16 %v627, %v624
    %v853 = vpack.c.b16 %v628, %v625
    %v854 = vpack.c.b16 %v629, %v626
    %v855 = vpack.c.b16 %v633, %v630
    %v856 = vpack.c.b16 %v634, %v631
    %v857 = vpack.c.b16 %v635, %v632
    %v858 = vpack.c.b16 %v639, %v636
    %v859 = vpack.c.b16 %v640, %v637
    %v860 = vpack.c.b16 %v641, %v638
    %v861 = vpack.c.b16 %v645, %v642
    %v862 = vpack.c.b16 %v646, %v643
    %v863 = vpack.c.b16 %v647, %v644
    %v864 = vpack.c.b16 %v651, %v648
    %v865 = vpack.c.b16 %v652, %v649
    %v866 = vpack.c.b16 %v653, %v650
    %v867 = vpack.c.b16 %v657, %v654
    %v868 = vpack.c.b16 %v658, %v655
    %v869 = vpack.c.b16 %v659, %v656
    %v870 = vpack.c.b16 %v663, %v660
    %v871 = vpack.c.b16 %v664, %v661
    %v872 = vpack.c.b16 %v665, %v662
    %v873 = vpack.c.b16 %v669, %v666
    %v874 = vpack.c.b16 %v670, %v667
    %v875 = vpack.c.b16 %v671, %v668
    %v876 = vpack.c.b16 %v675, %v672
    %v877 = vpack.c.b16 %v676, %v673
    %v878 = vpack.c.b16 %v677, %v674
    %v879 = vpack.c.b16 %v681, %v678
    %v880 = vpack.c.b16 %v682, %v679
    %v881 = vpack.c.b16 %v683, %v680
    %v882 = vpack.c.b16 %v687, %v684
    %v883 = vpack.c.b16 %v688, %v685
    %v884 = vpack.c.b16 %v689, %v686
    %v885 = vpack.c.b16 %v693, %v690
    %v886 = vpack.c.b16 %v694, %v691
    %v887 = vpack.c.b16 %v695, %v692
    %v888 = vpack.c.b16 %v699, %v696
    %v889 = vpack.c.b16 %v700, %v697
    %v890 = vpack.c.b16 %v701, %v698
    %v891 = vpack.c.b16 %v705, %v702
    %v892 = vpack.c.b16 %v706, %v703
    %v893 = vpack.c.b16 %v707, %v704
    %v894 = vpack.c.b16 %v711, %v708
    %v895 = vpack.c.b16 %v712, %v709
    %v896 = vpack.c.b16 %v713, %v710
    %v897 = vpack.c.b16 %v717, %v714
    %v898 = vpack.c.b16 %v718, %v715
    %v899 = vpack.c.b16 %v719, %v716
    %v900 = vpack.c.b16 %v723, %v720
    %v901 = vpack.c.b16 %v724, %v721
    %v902 = vpack.c.b16 %v725, %v722
    %v903 = vpack.c.b16 %v729, %v726
    %v904 = vpack.c.b16 %v730, %v727
    %v905 = vpack.c.b16 %v731, %v728
    %v906 = vpack.c.b16 %v735, %v732
    %v907 = vpack.c.b16 %v736, %v733
    %v908 = vpack.c.b16 %v737, %v734
    %v909 = vpack.c.b16 %v741, %v738
    %v910 = vpack.c.b16 %v742, %v739
    %v911 = vpack.c.b16 %v743, %v740
    %v912 = vpack.c.b16 %v747, %v744
    %v913 = vpack.c.b16 %v748, %v745
    %v914 = vpack.c.b16 %v749, %v746
    %v915 = vpack.c.b16 %v753, %v750
    %v916 = vpack.c.b16 %v754, %v751
    %v917 = vpack.c.b16 %v755, %v752
    %v918 = vpack.c.b16 %v759, %v756
    %v919 = vpack.c.b16 %v760, %v757
    %v920 = vpack.c.b16 %v761, %v758
    %v921 = vpack.c.b16 %v765, %v762
    %v922 = vpack.c.b16 %v766, %v763
    %v923 = vpack.c.b16 %v767, %v764
    %v924 = vpack.c.b16 %v771, %v768
    %v925 = vpack.c.b16 %v772, %v769
    %v926 = vpack.c.b16 %v773, %v770
    %v927 = vpack.c.b16 %v777, %v774
    %v928 = vpack.c.b16 %v778, %v775
    %v929 = vpack.c.b16 %v779, %v776
    %v930 = vpack.c.b16 %v783, %v780
    %v931 = vpack.c.b16 %v784, %v781
    %v932 = vpack.c.b16 %v785, %v782
    %vm1080 = vcmask 130048
    %v1082 = vsel %vm1080, %v289, 0
    %1084 = vmatprep.subr.bf16.mxu0 %v787
    %1085 = vmatpush1.bf16.msra.mxu0 %v786
    %1086 = vmatprep.subr.bf16.mxu0 %v790
    %1087 = vmatpush1.bf16.msra.mxu0 %v789
    %1088 = vmatprep.subr.bf16.mxu0 %v793
    %1089 = vmatpush1.bf16.msra.mxu0 %v792
    %1090 = vmatprep.subr.bf16.mxu0 %v796
    %1091 = vmatpush1.bf16.msra.mxu0 %v795
    %1092 = vmatprep.subr.bf16.mxu0 %v799
    %1093 = vmatpush1.bf16.msra.mxu0 %v798
    %1094 = vmatprep.subr.bf16.mxu0 %v802
    %1095 = vmatpush1.bf16.msra.mxu0 %v801
    %1096 = vmatprep.subr.bf16.mxu0 %v805
    %1097 = vmatpush1.bf16.msra.mxu0 %v804
    %1098 = vmatprep.subr.bf16.mxu0 %v808
    %1099 = vmatpush1.bf16.msra.mxu0 %v807
    %1100 = vmatprep.subr.bf16.mxu0 %v811
    %1101 = vmatpush1.bf16.msra.mxu0 %v810
    %1102 = vmatprep.subr.bf16.mxu0 %v814
    %1103 = vmatpush1.bf16.msra.mxu0 %v813
    %1104 = vmatprep.subr.bf16.mxu0 %v817
    %1105 = vmatpush1.bf16.msra.mxu0 %v816
    %1106 = vmatprep.subr.bf16.mxu0 %v820
    %1107 = vmatpush1.bf16.msra.mxu0 %v819
    %1108 = vmatprep.subr.bf16.mxu0 %v823
    %1109 = vmatpush1.bf16.msra.mxu0 %v822
    %1110 = vmatprep.subr.bf16.mxu0 %v826
    %1111 = vmatpush1.bf16.msra.mxu0 %v825
    %1112 = vmatprep.subr.bf16.mxu0 %v829
    %1113 = vmatpush1.bf16.msra.mxu0 %v828
    %1114 = vmatprep.subr.bf16.mxu0 %v832
    %1115 = vmatpush1.bf16.msra.mxu0 %v831
    %1116 = vmatprep.mubr.bf16.mxu0 %v284
    %1117 = vmatmul.mubr.bf16.gmra.mrb[0].mxu0 %v283
    %v1118 = vpop.f32.mrb[0].mxu0
    %v1119 = vadd.f32 %v260, %v1118
    %v1120 = vpop.f32.mrb[0].mxu0
    %v1121 = vadd.f32 %v264, %v1120
    %v1122 = vpop.f32.mrb[0].mxu0
    %v1123 = vpop.f32.mrb[0].mxu0
    %1124 = vdwg.mxu0
    %1125 = vmatprep.subr.bf16.mxu0 %v835
    %1126 = vmatpush1.bf16.msra.mxu0 %v834
    %1127 = vmatprep.subr.bf16.mxu0 %v838
    %1128 = vmatpush1.bf16.msra.mxu0 %v837
    %1129 = vmatprep.subr.bf16.mxu0 %v841
    %1130 = vmatpush1.bf16.msra.mxu0 %v840
    %1131 = vmatprep.subr.bf16.mxu0 %v844
    %1132 = vmatpush1.bf16.msra.mxu0 %v843
    %1133 = vmatprep.subr.bf16.mxu0 %v847
    %1134 = vmatpush1.bf16.msra.mxu0 %v846
    %1135 = vmatprep.subr.bf16.mxu0 %v850
    %1136 = vmatpush1.bf16.msra.mxu0 %v849
    %1137 = vmatprep.subr.bf16.mxu0 %v853
    %1138 = vmatpush1.bf16.msra.mxu0 %v852
    %1139 = vmatprep.subr.bf16.mxu0 %v856
    %1140 = vmatpush1.bf16.msra.mxu0 %v855
    %1141 = vmatprep.subr.bf16.mxu0 %v859
    %1142 = vmatpush1.bf16.msra.mxu0 %v858
    %1143 = vmatprep.subr.bf16.mxu0 %v862
    %1144 = vmatpush1.bf16.msra.mxu0 %v861
    %1145 = vmatprep.subr.bf16.mxu0 %v865
    %1146 = vmatpush1.bf16.msra.mxu0 %v864
    %1147 = vmatprep.subr.bf16.mxu0 %v868
    %1148 = vmatpush1.bf16.msra.mxu0 %v867
    %1149 = vmatprep.subr.bf16.mxu0 %v871
    %1150 = vmatpush1.bf16.msra.mxu0 %v870
    %1151 = vmatprep.subr.bf16.mxu0 %v874
    %1152 = vmatpush1.bf16.msra.mxu0 %v873
    %1153 = vmatprep.subr.bf16.mxu0 %v877
    %1154 = vmatpush1.bf16.msra.mxu0 %v876
    %1155 = vmatprep.subr.bf16.mxu0 %v880
    %1156 = vmatpush1.bf16.msra.mxu0 %v879
    %1157 = vmatprep.mubr.bf16.mxu0 %v286
    %1158 = vmatmul.mubr.bf16.gmra.mrb[0].mxu0 %v285
    %v1159 = vpop.f32.mrb[0].mxu0
    %v1160 = vadd.f32 %v1119, %v1159
    %v1161 = vpop.f32.mrb[0].mxu0
    %v1162 = vadd.f32 %v1121, %v1161
    %v1163 = vpop.f32.mrb[0].mxu0
    %v1164 = vpop.f32.mrb[0].mxu0
    %1165 = vdwg.mxu0
    %1166 = vmatprep.subr.bf16.mxu0 %v883
    %1167 = vmatpush1.bf16.msra.mxu0 %v882
    %1168 = vmatprep.subr.bf16.mxu0 %v886
    %1169 = vmatpush1.bf16.msra.mxu0 %v885
    %1170 = vmatprep.subr.bf16.mxu0 %v889
    %1171 = vmatpush1.bf16.msra.mxu0 %v888
    %1172 = vmatprep.subr.bf16.mxu0 %v892
    %1173 = vmatpush1.bf16.msra.mxu0 %v891
    %1174 = vmatprep.subr.bf16.mxu0 %v895
    %1175 = vmatpush1.bf16.msra.mxu0 %v894
    %1176 = vmatprep.subr.bf16.mxu0 %v898
    %1177 = vmatpush1.bf16.msra.mxu0 %v897
    %1178 = vmatprep.subr.bf16.mxu0 %v901
    %1179 = vmatpush1.bf16.msra.mxu0 %v900
    %1180 = vmatprep.subr.bf16.mxu0 %v904
    %1181 = vmatpush1.bf16.msra.mxu0 %v903
    %1182 = vmatprep.subr.bf16.mxu0 %v907
    %1183 = vmatpush1.bf16.msra.mxu0 %v906
    %1184 = vmatprep.subr.bf16.mxu0 %v910
    %1185 = vmatpush1.bf16.msra.mxu0 %v909
    %1186 = vmatprep.subr.bf16.mxu0 %v913
    %1187 = vmatpush1.bf16.msra.mxu0 %v912
    %1188 = vmatprep.subr.bf16.mxu0 %v916
    %1189 = vmatpush1.bf16.msra.mxu0 %v915
    %1190 = vmatprep.subr.bf16.mxu0 %v919
    %1191 = vmatpush1.bf16.msra.mxu0 %v918
    %1192 = vmatprep.subr.bf16.mxu0 %v922
    %1193 = vmatpush1.bf16.msra.mxu0 %v921
    %1194 = vmatprep.subr.bf16.mxu0 %v925
    %1195 = vmatpush1.bf16.msra.mxu0 %v924
    %1196 = vmatprep.subr.bf16.mxu0 %v928
    %1197 = vmatpush1.bf16.msra.mxu0 %v927
    %1198 = vmatprep.mubr.bf16.mxu0 %v288
    %1199 = vmatmul.mubr.bf16.gmra.mrb[0].mxu0 %v287
    %v1200 = vpop.f32.mrb[0].mxu0
    %v1201 = vadd.f32 %v1160, %v1200
    %v1202 = vpop.f32.mrb[0].mxu0
    %v1203 = vadd.f32 %v1162, %v1202
    %v1204 = vpop.f32.mrb[0].mxu0
    %v1205 = vpop.f32.mrb[0].mxu0
    %1206 = vdwg.mxu0
    %1207 = vmatprep.subr.bf16.mxu0 %v931
    %1208 = vmatpush1.bf16.msra.mxu0 %v930
    %1209 = vmatprep.subr.bf16.mxu0 0
    %1210 = vmatpush1.bf16.msra.mxu0 0
    %1211 = vmatprep.subr.bf16.mxu0 0
    %1212 = vmatpush1.bf16.msra.mxu0 0
    %1213 = vmatprep.subr.bf16.mxu0 0
    %1214 = vmatpush1.bf16.msra.mxu0 0
    %1215 = vmatprep.subr.bf16.mxu0 0
    %1216 = vmatpush1.bf16.msra.mxu0 0
    %1217 = vmatprep.subr.bf16.mxu0 0
    %1218 = vmatpush1.bf16.msra.mxu0 0
    %1219 = vmatprep.subr.bf16.mxu0 0
    %1220 = vmatpush1.bf16.msra.mxu0 0
    %1221 = vmatprep.subr.bf16.mxu0 0
    %1222 = vmatpush1.bf16.msra.mxu0 0
    %1223 = vmatprep.subr.bf16.mxu0 0
    %1224 = vmatpush1.bf16.msra.mxu0 0
    %1225 = vmatprep.subr.bf16.mxu0 0
    %1226 = vmatpush1.bf16.msra.mxu0 0
    %1227 = vmatprep.subr.bf16.mxu0 0
    %1228 = vmatpush1.bf16.msra.mxu0 0
    %1229 = vmatprep.subr.bf16.mxu0 0
    %1230 = vmatpush1.bf16.msra.mxu0 0
    %1231 = vmatprep.subr.bf16.mxu0 0
    %1232 = vmatpush1.bf16.msra.mxu0 0
    %1233 = vmatprep.subr.bf16.mxu0 0
    %1234 = vmatpush1.bf16.msra.mxu0 0
    %1235 = vmatprep.subr.bf16.mxu0 0
    %1236 = vmatpush1.bf16.msra.mxu0 0
    %1237 = vmatprep.subr.bf16.mxu0 0
    %1238 = vmatpush1.bf16.msra.mxu0 0
    %1239 = vmatprep.mubr.bf16.mxu0 0
    %1240 = vmatmul.mubr.bf16.gmra.mrb[0].mxu0 %v1082
    %v1241 = vpop.f32.mrb[0].mxu0
    %v1242 = vadd.f32 %v1201, %v1241
    %v1243 = vpop.f32.mrb[0].mxu0
    %v1244 = vadd.f32 %v1203, %v1243
    %v1245 = vpop.f32.mrb[0].mxu0
    %v1246 = vpop.f32.mrb[0].mxu0
    %1247 = vdwg.mxu0
    %1248 = vmatprep.subr.bf16.mxu0 0
    %1249 = vmatpush1.bf16.msra.mxu0 %v788
    %1250 = vmatprep.subr.bf16.mxu0 0
    %1251 = vmatpush1.bf16.msra.mxu0 %v791
    %1252 = vmatprep.subr.bf16.mxu0 0
    %1253 = vmatpush1.bf16.msra.mxu0 %v794
    %1254 = vmatprep.subr.bf16.mxu0 0
    %1255 = vmatpush1.bf16.msra.mxu0 %v797
    %1256 = vmatprep.subr.bf16.mxu0 0
    %1257 = vmatpush1.bf16.msra.mxu0 %v800
    %1258 = vmatprep.subr.bf16.mxu0 0
    %1259 = vmatpush1.bf16.msra.mxu0 %v803
    %1260 = vmatprep.subr.bf16.mxu0 0
    %1261 = vmatpush1.bf16.msra.mxu0 %v806
    %1262 = vmatprep.subr.bf16.mxu0 0
    %1263 = vmatpush1.bf16.msra.mxu0 %v809
    %1264 = vmatprep.subr.bf16.mxu0 0
    %1265 = vmatpush1.bf16.msra.mxu0 %v812
    %1266 = vmatprep.subr.bf16.mxu0 0
    %1267 = vmatpush1.bf16.msra.mxu0 %v815
    %1268 = vmatprep.subr.bf16.mxu0 0
    %1269 = vmatpush1.bf16.msra.mxu0 %v818
    %1270 = vmatprep.subr.bf16.mxu0 0
    %1271 = vmatpush1.bf16.msra.mxu0 %v821
    %1272 = vmatprep.subr.bf16.mxu0 0
    %1273 = vmatpush1.bf16.msra.mxu0 %v824
    %1274 = vmatprep.subr.bf16.mxu0 0
    %1275 = vmatpush1.bf16.msra.mxu0 %v827
    %1276 = vmatprep.subr.bf16.mxu0 0
    %1277 = vmatpush1.bf16.msra.mxu0 %v830
    %1278 = vmatprep.subr.bf16.mxu0 0
    %1279 = vmatpush1.bf16.msra.mxu0 %v833
    %1280 = vmatprep.mubr.bf16.mxu0 %v284
    %1281 = vmatmul.mubr.bf16.gmra.mrb[0].mxu0 %v283
    %v1282 = vpop.f32.mrb[0].mxu0
    %v1283 = vadd.f32 %v268, %v1282
    %v1284 = vpop.f32.mrb[0].mxu0
    %v1285 = vpop.f32.mrb[0].mxu0
    %v1286 = vpop.f32.mrb[0].mxu0
    %1287 = vdwg.mxu0
    %1288 = vmatprep.subr.bf16.mxu0 0
    %1289 = vmatpush1.bf16.msra.mxu0 %v836
    %1290 = vmatprep.subr.bf16.mxu0 0
    %1291 = vmatpush1.bf16.msra.mxu0 %v839
    %1292 = vmatprep.subr.bf16.mxu0 0
    %1293 = vmatpush1.bf16.msra.mxu0 %v842
    %1294 = vmatprep.subr.bf16.mxu0 0
    %1295 = vmatpush1.bf16.msra.mxu0 %v845
    %1296 = vmatprep.subr.bf16.mxu0 0
    %1297 = vmatpush1.bf16.msra.mxu0 %v848
    %1298 = vmatprep.subr.bf16.mxu0 0
    %1299 = vmatpush1.bf16.msra.mxu0 %v851
    %1300 = vmatprep.subr.bf16.mxu0 0
    %1301 = vmatpush1.bf16.msra.mxu0 %v854
    %1302 = vmatprep.subr.bf16.mxu0 0
    %1303 = vmatpush1.bf16.msra.mxu0 %v857
    %1304 = vmatprep.subr.bf16.mxu0 0
    %1305 = vmatpush1.bf16.msra.mxu0 %v860
    %1306 = vmatprep.subr.bf16.mxu0 0
    %1307 = vmatpush1.bf16.msra.mxu0 %v863
    %1308 = vmatprep.subr.bf16.mxu0 0
    %1309 = vmatpush1.bf16.msra.mxu0 %v866
    %1310 = vmatprep.subr.bf16.mxu0 0
    %1311 = vmatpush1.bf16.msra.mxu0 %v869
    %1312 = vmatprep.subr.bf16.mxu0 0
    %1313 = vmatpush1.bf16.msra.mxu0 %v872
    %1314 = vmatprep.subr.bf16.mxu0 0
    %1315 = vmatpush1.bf16.msra.mxu0 %v875
    %1316 = vmatprep.subr.bf16.mxu0 0
    %1317 = vmatpush1.bf16.msra.mxu0 %v878
    %1318 = vmatprep.subr.bf16.mxu0 0
    %1319 = vmatpush1.bf16.msra.mxu0 %v881
    %1320 = vmatprep.mubr.bf16.mxu0 %v286
    %1321 = vmatmul.mubr.bf16.gmra.mrb[0].mxu0 %v285
    %v1322 = vpop.f32.mrb[0].mxu0
    %v1323 = vadd.f32 %v1283, %v1322
    %v1324 = vpop.f32.mrb[0].mxu0
    %v1325 = vpop.f32.mrb[0].mxu0
    %v1326 = vpop.f32.mrb[0].mxu0
    %1327 = vdwg.mxu0
    %1328 = vmatprep.subr.bf16.mxu0 0
    %1329 = vmatpush1.bf16.msra.mxu0 %v884
    %1330 = vmatprep.subr.bf16.mxu0 0
    %1331 = vmatpush1.bf16.msra.mxu0 %v887
    %1332 = vmatprep.subr.bf16.mxu0 0
    %1333 = vmatpush1.bf16.msra.mxu0 %v890
    %1334 = vmatprep.subr.bf16.mxu0 0
    %1335 = vmatpush1.bf16.msra.mxu0 %v893
    %1336 = vmatprep.subr.bf16.mxu0 0
    %1337 = vmatpush1.bf16.msra.mxu0 %v896
    %1338 = vmatprep.subr.bf16.mxu0 0
    %1339 = vmatpush1.bf16.msra.mxu0 %v899
    %1340 = vmatprep.subr.bf16.mxu0 0
    %1341 = vmatpush1.bf16.msra.mxu0 %v902
    %1342 = vmatprep.subr.bf16.mxu0 0
    %1343 = vmatpush1.bf16.msra.mxu0 %v905
    %1344 = vmatprep.subr.bf16.mxu0 0
    %1345 = vmatpush1.bf16.msra.mxu0 %v908
    %1346 = vmatprep.subr.bf16.mxu0 0
    %1347 = vmatpush1.bf16.msra.mxu0 %v911
    %1348 = vmatprep.subr.bf16.mxu0 0
    %1349 = vmatpush1.bf16.msra.mxu0 %v914
    %1350 = vmatprep.subr.bf16.mxu0 0
    %1351 = vmatpush1.bf16.msra.mxu0 %v917
    %1352 = vmatprep.subr.bf16.mxu0 0
    %1353 = vmatpush1.bf16.msra.mxu0 %v920
    %1354 = vmatprep.subr.bf16.mxu0 0
    %1355 = vmatpush1.bf16.msra.mxu0 %v923
    %1356 = vmatprep.subr.bf16.mxu0 0
    %1357 = vmatpush1.bf16.msra.mxu0 %v926
    %1358 = vmatprep.subr.bf16.mxu0 0
    %1359 = vmatpush1.bf16.msra.mxu0 %v929
    %1360 = vmatprep.mubr.bf16.mxu0 %v288
    %1361 = vmatmul.mubr.bf16.gmra.mrb[0].mxu0 %v287
    %v1362 = vpop.f32.mrb[0].mxu0
    %v1363 = vadd.f32 %v1323, %v1362
    %v1364 = vpop.f32.mrb[0].mxu0
    %v1365 = vpop.f32.mrb[0].mxu0
    %v1366 = vpop.f32.mrb[0].mxu0
    %1367 = vdwg.mxu0
    %1368 = vmatprep.subr.bf16.mxu0 0
    %1369 = vmatpush1.bf16.msra.mxu0 %v932
    %1370 = vmatprep.subr.bf16.mxu0 0
    %1371 = vmatpush1.bf16.msra.mxu0 0
    %1372 = vmatprep.subr.bf16.mxu0 0
    %1373 = vmatpush1.bf16.msra.mxu0 0
    %1374 = vmatprep.subr.bf16.mxu0 0
    %1375 = vmatpush1.bf16.msra.mxu0 0
    %1376 = vmatprep.subr.bf16.mxu0 0
    %1377 = vmatpush1.bf16.msra.mxu0 0
    %1378 = vmatprep.subr.bf16.mxu0 0
    %1379 = vmatpush1.bf16.msra.mxu0 0
    %1380 = vmatprep.subr.bf16.mxu0 0
    %1381 = vmatpush1.bf16.msra.mxu0 0
    %1382 = vmatprep.subr.bf16.mxu0 0
    %1383 = vmatpush1.bf16.msra.mxu0 0
    %1384 = vmatprep.subr.bf16.mxu0 0
    %1385 = vmatpush1.bf16.msra.mxu0 0
    %1386 = vmatprep.subr.bf16.mxu0 0
    %1387 = vmatpush1.bf16.msra.mxu0 0
    %1388 = vmatprep.subr.bf16.mxu0 0
    %1389 = vmatpush1.bf16.msra.mxu0 0
    %1390 = vmatprep.subr.bf16.mxu0 0
    %1391 = vmatpush1.bf16.msra.mxu0 0
    %1392 = vmatprep.subr.bf16.mxu0 0
    %1393 = vmatpush1.bf16.msra.mxu0 0
    %1394 = vmatprep.subr.bf16.mxu0 0
    %1395 = vmatpush1.bf16.msra.mxu0 0
    %1396 = vmatprep.subr.bf16.mxu0 0
    %1397 = vmatpush1.bf16.msra.mxu0 0
    %1398 = vmatprep.subr.bf16.mxu0 0
    %1399 = vmatpush1.bf16.msra.mxu0 0
    %1400 = vmatprep.mubr.bf16.mxu0 0
    %1401 = vmatmul.mubr.bf16.gmra.mrb[0].mxu0 %v1082
    %v1402 = vpop.f32.mrb[0].mxu0
    %v1403 = vadd.f32 %v1363, %v1402
    %v1404 = vpop.f32.mrb[0].mxu0
    %v1405 = vpop.f32.mrb[0].mxu0
    %v1406 = vpop.f32.mrb[0].mxu0
    %1407 = vdwg.mxu0
    %v1408 = vmax.f32 %v1242, 0.0
    %v1409 = vmax.f32 %v1244, 0.0
    %v1410 = vmax.f32 %v1403, 0.0
    %v1411 = vpack.c.bf16 %v1408, %v1408
    %v1412 = vpack.c.bf16 %v1409, %v1409
    %v1413 = vpack.c.bf16 %v1410, %v1410
    %v1414 = vld [vmem:[#allocation4] sm:$0xf]
    %v1415 = vld [vmem:[#allocation4 + $0x4] sm:$0xf]
    %v1416 = vld [vmem:[#allocation4 + $0x8] sm:$0xf]
    %v1417 = vld [vmem:[#allocation4 + $0xc] sm:$0xf]
    %v1418 = vld [vmem:[#allocation4 + $0x10] sm:$0xf]
    %v1419 = vld [vmem:[#allocation4 + $0x14] sm:$0xf]
    %v1420 = vld [vmem:[#allocation4 + $0x18] sm:$0xf]
    %v1421 = vld [vmem:[#allocation4 + $0x1c] sm:$0xf]
    %v1422 = vld [vmem:[#allocation4 + $0x20] sm:$0xf]
    %v1423 = vld [vmem:[#allocation4 + $0x24] sm:$0xf]
    %v1424 = vld [vmem:[#allocation4 + $0x28] sm:$0xf]
    %v1425 = vld [vmem:[#allocation4 + $0x2c] sm:$0xf]
    %v1426 = vld [vmem:[#allocation4 + $0x30] sm:$0xf]
    %v1427 = vld [vmem:[#allocation4 + $0x34] sm:$0xf]
    %v1428 = vld [vmem:[#allocation4 + $0x38] sm:$0xf]
    %v1429 = vld [vmem:[#allocation4 + $0x3c] sm:$0xf]
    %v1430 = vld [vmem:[#allocation4 + $0x40] sm:$0xf]
    %v1431 = vld [vmem:[#allocation4 + $0x44] sm:$0xf]
    %v1432 = vld [vmem:[#allocation4 + $0x48] sm:$0xf]
    %v1433 = vld [vmem:[#allocation4 + $0x4c] sm:$0xf]
    %v1434 = vld [vmem:[#allocation4 + $0x50] sm:$0xf]
    %v1435 = vld [vmem:[#allocation4 + $0x54] sm:$0xf]
    %v1436 = vld [vmem:[#allocation4 + $0x58] sm:$0xf]
    %v1437 = vld [vmem:[#allocation4 + $0x5c] sm:$0xf]
    %v1438 = vld [vmem:[#allocation4 + $0x60] sm:$0xf]
    %v1439 = vld [vmem:[#allocation4 + $0x64] sm:$0xf]
    %v1440 = vld [vmem:[#allocation4 + $0x68] sm:$0xf]
    %v1441 = vld [vmem:[#allocation4 + $0x6c] sm:$0xf]
    %v1442 = vld [vmem:[#allocation4 + $0x70] sm:$0xf]
    %v1443 = vld [vmem:[#allocation4 + $0x74] sm:$0xf]
    %v1444 = vld [vmem:[#allocation4 + $0x78] sm:$0xf]
    %v1445 = vld [vmem:[#allocation4 + $0x7c] sm:$0xf]
    %v1446 = vld [vmem:[#allocation4 + $0x80] sm:$0xf]
    %v1447 = vld [vmem:[#allocation4 + $0x84] sm:$0xf]
    %v1448 = vld [vmem:[#allocation4 + $0x88] sm:$0xf]
    %v1449 = vld [vmem:[#allocation4 + $0x8c] sm:$0xf]
    %v1450 = vld [vmem:[#allocation4 + $0x90] sm:$0xf]
    %v1451 = vld [vmem:[#allocation4 + $0x94] sm:$0xf]
    %v1452 = vld [vmem:[#allocation4 + $0x98] sm:$0xf]
    %v1453 = vld [vmem:[#allocation4 + $0x9c] sm:$0xf]
    %v1454 = vld [vmem:[#allocation4 + $0xa0] sm:$0xf]
    %v1455 = vld [vmem:[#allocation4 + $0xa4] sm:$0xf]
    %v1456 = vld [vmem:[#allocation4 + $0xa8] sm:$0xf]
    %v1457 = vld [vmem:[#allocation4 + $0xac] sm:$0xf]
    %v1458 = vld [vmem:[#allocation4 + $0xb0] sm:$0xf]
    %v1459 = vld [vmem:[#allocation4 + $0xb4] sm:$0xf]
    %v1460 = vld [vmem:[#allocation4 + $0xb8] sm:$0xf]
    %v1461 = vld [vmem:[#allocation4 + $0xbc] sm:$0xf]
    %v1462 = vld [vmem:[%s4] sm:$0x1]
    %v1464 = vlaneseq
    %v1465 = vshrl.u32 %v1464, 7
    %v1466 = vsub.s32 0, %v1465
    %v1467 = vrot.slane %v1462, %v1466
    %v1517 = vunpack.c.l.b16 %v1414
    %v1518 = vunpack.c.l.b16 %v1415
    %v1519 = vunpack.c.l.b16 %v1416
    %v1520 = vunpack.c.l.b16 %v1417
    %v1521 = vunpack.c.l.b16 %v1418
    %v1522 = vunpack.c.l.b16 %v1419
    %v1523 = vunpack.c.l.b16 %v1420
    %v1524 = vunpack.c.l.b16 %v1421
    %v1525 = vunpack.c.l.b16 %v1422
    %v1526 = vunpack.c.l.b16 %v1423
    %v1527 = vunpack.c.l.b16 %v1424
    %v1528 = vunpack.c.l.b16 %v1425
    %v1529 = vunpack.c.l.b16 %v1426
    %v1530 = vunpack.c.l.b16 %v1427
    %v1531 = vunpack.c.l.b16 %v1428
    %v1532 = vunpack.c.l.b16 %v1429
    %v1533 = vunpack.c.l.b16 %v1430
    %v1534 = vunpack.c.l.b16 %v1431
    %v1535 = vunpack.c.l.b16 %v1432
    %v1536 = vunpack.c.l.b16 %v1433
    %v1537 = vunpack.c.l.b16 %v1434
    %v1538 = vunpack.c.l.b16 %v1435
    %v1539 = vunpack.c.l.b16 %v1436
    %v1540 = vunpack.c.l.b16 %v1437
    %v1541 = vunpack.c.l.b16 %v1438
    %v1542 = vunpack.c.l.b16 %v1439
    %v1543 = vunpack.c.l.b16 %v1440
    %v1544 = vunpack.c.l.b16 %v1441
    %v1545 = vunpack.c.l.b16 %v1442
    %v1546 = vunpack.c.l.b16 %v1443
    %v1547 = vunpack.c.l.b16 %v1444
    %v1548 = vunpack.c.l.b16 %v1445
    %v1549 = vunpack.c.l.b16 %v1446
    %v1550 = vunpack.c.l.b16 %v1447
    %v1551 = vunpack.c.l.b16 %v1448
    %v1552 = vunpack.c.l.b16 %v1449
    %v1553 = vunpack.c.l.b16 %v1450
    %v1554 = vunpack.c.l.b16 %v1451
    %v1555 = vunpack.c.l.b16 %v1452
    %v1556 = vunpack.c.l.b16 %v1453
    %v1557 = vunpack.c.l.b16 %v1454
    %v1558 = vunpack.c.l.b16 %v1455
    %v1559 = vunpack.c.l.b16 %v1456
    %v1560 = vunpack.c.l.b16 %v1457
    %v1561 = vunpack.c.l.b16 %v1458
    %v1562 = vunpack.c.l.b16 %v1459
    %v1563 = vunpack.c.l.b16 %v1460
    %v1564 = vunpack.c.l.b16 %v1461
    %v1565 = vpack.c.b16 %v1518, %v1517
    %v1566 = vpack.c.b16 %v1520, %v1519
    %v1567 = vpack.c.b16 %v1522, %v1521
    %v1568 = vpack.c.b16 %v1524, %v1523
    %v1569 = vpack.c.b16 %v1526, %v1525
    %v1570 = vpack.c.b16 %v1528, %v1527
    %v1571 = vpack.c.b16 %v1530, %v1529
    %v1572 = vpack.c.b16 %v1532, %v1531
    %v1573 = vpack.c.b16 %v1534, %v1533
    %v1574 = vpack.c.b16 %v1536, %v1535
    %v1575 = vpack.c.b16 %v1538, %v1537
    %v1576 = vpack.c.b16 %v1540, %v1539
    %v1577 = vpack.c.b16 %v1542, %v1541
    %v1578 = vpack.c.b16 %v1544, %v1543
    %v1579 = vpack.c.b16 %v1546, %v1545
    %v1580 = vpack.c.b16 %v1548, %v1547
    %v1581 = vpack.c.b16 %v1550, %v1549
    %v1582 = vpack.c.b16 %v1552, %v1551
    %v1583 = vpack.c.b16 %v1554, %v1553
    %v1584 = vpack.c.b16 %v1556, %v1555
    %v1585 = vpack.c.b16 %v1558, %v1557
    %v1586 = vpack.c.b16 %v1560, %v1559
    %v1587 = vpack.c.b16 %v1562, %v1561
    %v1588 = vpack.c.b16 %v1564, %v1563
    %1613 = vmatprep.subr.bf16.mxu0 0
    %1614 = vmatpush1.bf16.msra.mxu0 %v1565
    %1615 = vmatprep.subr.bf16.mxu0 0
    %1616 = vmatpush1.bf16.msra.mxu0 %v1566
    %1617 = vmatprep.subr.bf16.mxu0 0
    %1618 = vmatpush1.bf16.msra.mxu0 %v1567
    %1619 = vmatprep.subr.bf16.mxu0 0
    %1620 = vmatpush1.bf16.msra.mxu0 %v1568
    %1621 = vmatprep.subr.bf16.mxu0 0
    %1622 = vmatpush1.bf16.msra.mxu0 %v1569
    %1623 = vmatprep.subr.bf16.mxu0 0
    %1624 = vmatpush1.bf16.msra.mxu0 %v1570
    %1625 = vmatprep.subr.bf16.mxu0 0
    %1626 = vmatpush1.bf16.msra.mxu0 %v1571
    %1627 = vmatprep.subr.bf16.mxu0 0
    %1628 = vmatpush1.bf16.msra.mxu0 %v1572
    %1629 = vmatprep.subr.bf16.mxu0 0
    %1630 = vmatpush1.bf16.msra.mxu0 %v1573
    %1631 = vmatprep.subr.bf16.mxu0 0
    %1632 = vmatpush1.bf16.msra.mxu0 %v1574
    %1633 = vmatprep.subr.bf16.mxu0 0
    %1634 = vmatpush1.bf16.msra.mxu0 %v1575
    %1635 = vmatprep.subr.bf16.mxu0 0
    %1636 = vmatpush1.bf16.msra.mxu0 %v1576
    %1637 = vmatprep.subr.bf16.mxu0 0
    %1638 = vmatpush1.bf16.msra.mxu0 %v1577
    %1639 = vmatprep.subr.bf16.mxu0 0
    %1640 = vmatpush1.bf16.msra.mxu0 %v1578
    %1641 = vmatprep.subr.bf16.mxu0 0
    %1642 = vmatpush1.bf16.msra.mxu0 %v1579
    %1643 = vmatprep.subr.bf16.mxu0 0
    %1644 = vmatpush1.bf16.msra.mxu0 %v1580
    %1645 = vmatprep.mubr.bf16.mxu0 %v1412
    %1646 = vmatmul.mubr.bf16.gmra.mrb[0].mxu0 %v1411
    %v1647 = vpop.f32.mrb[0].mxu0
    %v1648 = vadd.f32 %v1467, %v1647
    %v1649 = vpop.f32.mrb[0].mxu0
    %v1650 = vpop.f32.mrb[0].mxu0
    %v1651 = vpop.f32.mrb[0].mxu0
    %1652 = vdwg.mxu0
    %1653 = vmatprep.subr.bf16.mxu0 0
    %1654 = vmatpush1.bf16.msra.mxu0 %v1581
    %1655 = vmatprep.subr.bf16.mxu0 0
    %1656 = vmatpush1.bf16.msra.mxu0 %v1582
    %1657 = vmatprep.subr.bf16.mxu0 0
    %1658 = vmatpush1.bf16.msra.mxu0 %v1583
    %1659 = vmatprep.subr.bf16.mxu0 0
    %1660 = vmatpush1.bf16.msra.mxu0 %v1584
    %1661 = vmatprep.subr.bf16.mxu0 0
    %1662 = vmatpush1.bf16.msra.mxu0 %v1585
    %1663 = vmatprep.subr.bf16.mxu0 0
    %1664 = vmatpush1.bf16.msra.mxu0 %v1586
    %1665 = vmatprep.subr.bf16.mxu0 0
    %1666 = vmatpush1.bf16.msra.mxu0 %v1587
    %1667 = vmatprep.subr.bf16.mxu0 0
    %1668 = vmatpush1.bf16.msra.mxu0 %v1588
    %1669 = vmatprep.subr.bf16.mxu0 0
    %1670 = vmatpush1.bf16.msra.mxu0 0
    %1671 = vmatprep.subr.bf16.mxu0 0
    %1672 = vmatpush1.bf16.msra.mxu0 0
    %1673 = vmatprep.subr.bf16.mxu0 0
    %1674 = vmatpush1.bf16.msra.mxu0 0
    %1675 = vmatprep.subr.bf16.mxu0 0
    %1676 = vmatpush1.bf16.msra.mxu0 0
    %1677 = vmatprep.subr.bf16.mxu0 0
    %1678 = vmatpush1.bf16.msra.mxu0 0
    %1679 = vmatprep.subr.bf16.mxu0 0
    %1680 = vmatpush1.bf16.msra.mxu0 0
    %1681 = vmatprep.subr.bf16.mxu0 0
    %1682 = vmatpush1.bf16.msra.mxu0 0
    %1683 = vmatprep.subr.bf16.mxu0 0
    %1684 = vmatpush1.bf16.msra.mxu0 0
    %1685 = vmatprep.mubr.bf16.mxu0 0
    %1686 = vmatmul.mubr.bf16.gmra.mrb[0].mxu0 %v1413
    %v1687 = vpop.f32.mrb[0].mxu0
    %v1688 = vadd.f32 %v1648, %v1687
    %v1689 = vpop.f32.mrb[0].mxu0
    %v1690 = vpop.f32.mrb[0].mxu0
    %v1691 = vpop.f32.mrb[0].mxu0
    %1692 = vdwg.mxu0
    %v1693 = vmax.f32 %v1688, 0.0
    %v1694 = vpack.c.bf16 %v1693, %v1693
    %v1695 = vld [vmem:[%s5] sm:$0xf]
    %v1696 = vld [vmem:[%s5 + $0x4] sm:$0xf]
    %v1697 = vld [vmem:[%s5 + $0x8] sm:$0xf]
    %v1698 = vld [vmem:[%s5 + $0xc] sm:$0xf]
    %v1699 = vld [vmem:[%s5 + $0x10] sm:$0xf]
    %v1700 = vld [vmem:[%s5 + $0x14] sm:$0xf]
    %v1701 = vld [vmem:[%s5 + $0x18] sm:$0xf]
    %v1702 = vld [vmem:[%s5 + $0x1c] sm:$0xf]
    %v1703 = vld [vmem:[%s5 + $0x20] sm:$0xf]
    %v1704 = vld [vmem:[%s5 + $0x24] sm:$0xf]
    %v1705 = vld [vmem:[%s5 + $0x28] sm:$0xf]
    %v1706 = vld [vmem:[%s5 + $0x2c] sm:$0xf]
    %v1707 = vld [vmem:[%s5 + $0x30] sm:$0xf]
    %v1708 = vld [vmem:[%s5 + $0x34] sm:$0xf]
    %v1709 = vld [vmem:[%s5 + $0x38] sm:$0xf]
    %v1710 = vld [vmem:[%s5 + $0x3c] sm:$0xf]
    %v1711 = vld [vmem:[%s6] sm:$0x1]
    %v1713 = vlaneseq
    %v1714 = vshrl.u32 %v1713, 7
    %v1715 = vsub.s32 0, %v1714
    %v1716 = vrot.slane %v1711, %v1715
    %v1734 = vunpack.c.l.b16 %v1695
    %v1735 = vunpack.c.l.b16 %v1696
    %v1736 = vunpack.c.l.b16 %v1697
    %v1737 = vunpack.c.l.b16 %v1698
    %v1738 = vunpack.c.l.b16 %v1699
    %v1739 = vunpack.c.l.b16 %v1700
    %v1740 = vunpack.c.l.b16 %v1701
    %v1741 = vunpack.c.l.b16 %v1702
    %v1742 = vunpack.c.l.b16 %v1703
    %v1743 = vunpack.c.l.b16 %v1704
    %v1744 = vunpack.c.l.b16 %v1705
    %v1745 = vunpack.c.l.b16 %v1706
    %v1746 = vunpack.c.l.b16 %v1707
    %v1747 = vunpack.c.l.b16 %v1708
    %v1748 = vunpack.c.l.b16 %v1709
    %v1749 = vunpack.c.l.b16 %v1710
    %v1750 = vpack.c.b16 %v1735, %v1734
    %v1751 = vpack.c.b16 %v1737, %v1736
    %v1752 = vpack.c.b16 %v1739, %v1738
    %v1753 = vpack.c.b16 %v1741, %v1740
    %v1754 = vpack.c.b16 %v1743, %v1742
    %v1755 = vpack.c.b16 %v1745, %v1744
    %v1756 = vpack.c.b16 %v1747, %v1746
    %v1757 = vpack.c.b16 %v1749, %v1748
    %1766 = vmatprep.subr.bf16.mxu0 0
    %1767 = vmatpush1.bf16.msra.mxu0 %v1750
    %1768 = vmatprep.subr.bf16.mxu0 0
    %1769 = vmatpush1.bf16.msra.mxu0 %v1751
    %1770 = vmatprep.subr.bf16.mxu0 0
    %1771 = vmatpush1.bf16.msra.mxu0 %v1752
    %1772 = vmatprep.subr.bf16.mxu0 0
    %1773 = vmatpush1.bf16.msra.mxu0 %v1753
    %1774 = vmatprep.subr.bf16.mxu0 0
    %1775 = vmatpush1.bf16.msra.mxu0 %v1754
    %1776 = vmatprep.subr.bf16.mxu0 0
    %1777 = vmatpush1.bf16.msra.mxu0 %v1755
    %1778 = vmatprep.subr.bf16.mxu0 0
    %1779 = vmatpush1.bf16.msra.mxu0 %v1756
    %1780 = vmatprep.subr.bf16.mxu0 0
    %1781 = vmatpush1.bf16.msra.mxu0 %v1757
    %1782 = vmatprep.subr.bf16.mxu0 0
    %1783 = vmatpush1.bf16.msra.mxu0 0
    %1784 = vmatprep.subr.bf16.mxu0 0
    %1785 = vmatpush1.bf16.msra.mxu0 0
    %1786 = vmatprep.subr.bf16.mxu0 0
    %1787 = vmatpush1.bf16.msra.mxu0 0
    %1788 = vmatprep.subr.bf16.mxu0 0
    %1789 = vmatpush1.bf16.msra.mxu0 0
    %1790 = vmatprep.subr.bf16.mxu0 0
    %1791 = vmatpush1.bf16.msra.mxu0 0
    %1792 = vmatprep.subr.bf16.mxu0 0
    %1793 = vmatpush1.bf16.msra.mxu0 0
    %1794 = vmatprep.subr.bf16.mxu0 0
    %1795 = vmatpush1.bf16.msra.mxu0 0
    %1796 = vmatprep.subr.bf16.mxu0 0
    %1797 = vmatpush1.bf16.msra.mxu0 0
    %1798 = vmatprep.mubr.bf16.mxu0 0
    %1799 = vmatmul.mubr.bf16.gmra.mrb[0].mxu0 %v1694
    %v1800 = vpop.f32.mrb[0].mxu0
    %v1801 = vadd.f32 %v1716, %v1800
    %v1802 = vpop.f32.mrb[0].mxu0
    %v1803 = vpop.f32.mrb[0].mxu0
    %v1804 = vpop.f32.mrb[0].mxu0
    %1805 = vdwg.mxu0
    %v1806 = vmax.f32 %v1801, 0.0
    %v1807 = vpack.c.bf16 %v1806, %v1806
    %1808 = vst [vmem:[%s7] sm:$0xf] %v1807
    // Predicated region
    $region38: #{fc3_forward.1} parent=1 // pred_check
      _
    $region39: #{fc3_forward.1} parent=1 // pred_check_branch
      %1810 = sbr.rel (0) target = $region41
    $region40: #{fc3_forward.1} parent=1 // pred_region
      _
    $region41: #{fc3_forward.1} parent=1 // pred_fallthru
      _
    // Predicated region
    $region42: #{fc3_forward.1} parent=1 // pred_check
      _
    $region43: #{fc3_forward.1} parent=1 // pred_check_branch
      %1812 = sbr.rel (0) target = $region45
    $region44: #{fc3_forward.1} parent=1 // pred_region
      _
    $region45: #{fc3_forward.1} parent=1 // pred_fallthru
      _
    %1813 = vsyncpa [#allocation3], 1
    %1814 = vsyncpa [#allocation5], 1

</llo_original>
